<compile_context>
chip_gen: v5e
topology: v5e:2x2
jax: 0.10.0
libtpu: 0.0.40
codegen_flags: <defaults>
</compile_context>

<pallas_src>
import jax
import jax.numpy as jnp
from jax.experimental import pallas as pl
from jax.experimental.pallas import tpu as pltpu


def _encoder_gru_seq_kernel(toks_ref,      # SMEM  (T,)  int32  (scalar prefetch)
                            emb_ref,       # VMEM  (V, H)       resident
                            w_ref,         # VMEM  (2H, 4H)     resident (fused)
                            b_ref,         # VMEM  (1, 4H)      resident (fused)
                            h0_ref,        # VMEM  (1, 1, H)    initial hidden
                            out_ref,       # VMEM  (1, 1, H)    per-step output block
                            h_scratch):    # VMEM  (1, H)       hidden carry
    H = h_scratch.shape[-1]
    t = pl.program_id(0)

    @pl.when(t == 0)
    def _():
        h_scratch[...] = h0_ref[0]

    tok = toks_ref[t]
    # Embedding lookup: dynamic row gather from the VMEM-resident table.
    # TODO(synk): for large vocabularies (esp. v7x's 64 MiB VMEM), keep the
    # table in HBM (memory_space=pl.ANY) and row-gather via index_map / DMA.
    x = emb_ref[pl.ds(tok, 1), :]            # (1, H)
    h = h_scratch[...]                       # (1, H)

    # Single fused MXU push: [x | h] (1, 2H) @ W_fused (2H, 4H).
    xh = jnp.concatenate([x, h], axis=1)     # (1, 2H)
    g = jnp.dot(xh, w_ref[...], preferred_element_type=jnp.float32) + b_ref[...]

    # g columns: [0:H]=r pre-act (x+h summed), [H:2H]=z pre-act, [2H:3H]=i_n, [3H:4H]=h_n
    rz = jax.nn.sigmoid(g[:, 0:2 * H])
    r = rz[:, 0:H]
    z = rz[:, H:2 * H]
    n = jnp.tanh(g[:, 2 * H:3 * H] + r * g[:, 3 * H:4 * H])
    h_new = (1.0 - z) * n + z * h            # (1, H)

    h_scratch[...] = h_new
    out_ref[...] = h_new.reshape(out_ref.shape).astype(out_ref.dtype)


def prepare_params(params):
    """Fuse GRU weights/biases once (NOT per forward call)."""
    w_ih = params["weight_ih"]               # (3H, H), rows ordered [r | z | n]
    w_hh = params["weight_hh"]               # (3H, H)
    b_ih = params["bias_ih"]                 # (3H,)
    b_hh = params["bias_hh"]                 # (3H,)
    H = w_ih.shape[1]

    wx = w_ih.T                              # (H, 3H)
    wh = w_hh.T                              # (H, 3H)
    zeros = jnp.zeros((H, H), dtype=wx.dtype)
    # (2H, 4H): cols = [r,z (x and h paths summed by the matmul) | i_n | h_n]
    w_fused = jnp.concatenate([
        jnp.concatenate([wx[:, 0:2 * H], wx[:, 2 * H:3 * H], zeros], axis=1),
        jnp.concatenate([wh[:, 0:2 * H], zeros, wh[:, 2 * H:3 * H]], axis=1),
    ], axis=0)
    b_fused = jnp.concatenate([
        b_ih[0:2 * H] + b_hh[0:2 * H],       # pre-summed r/z biases
        b_ih[2 * H:3 * H],                   # b_in
        b_hh[2 * H:3 * H],                   # b_hn
    ]).reshape(1, 4 * H)

    return {"embedding": params["embedding"],
            "w_fused": w_fused,
            "b_fused": b_fused}


@jax.jit
def encoder_rnn_forward_seq(tokens, hidden0, prepared):
    """tokens: int32 (T,), hidden0: (1,1,H) -> (outputs (T,1,H), hidden (1,1,H))."""
    emb = prepared["embedding"]
    w_fused = prepared["w_fused"]
    b_fused = prepared["b_fused"]
    T = tokens.shape[0]
    V, H = emb.shape

    outputs = pl.pallas_call(
        _encoder_gru_seq_kernel,
        out_shape=jax.ShapeDtypeStruct((T, 1, H), jnp.float32),
        grid_spec=pltpu.PrefetchScalarGridSpec(
            num_scalar_prefetch=1,
            grid=(T,),
            in_specs=[
                pl.BlockSpec((V, H), lambda t, toks: (0, 0)),          # embedding
                pl.BlockSpec((2 * H, 4 * H), lambda t, toks: (0, 0)),  # fused W
                pl.BlockSpec((1, 4 * H), lambda t, toks: (0, 0)),      # fused b
                pl.BlockSpec((1, 1, H), lambda t, toks: (0, 0, 0)),    # h0
            ],
            out_specs=pl.BlockSpec((1, 1, H), lambda t, toks: (t, 0, 0)),
            scratch_shapes=[pltpu.VMEM((1, H), jnp.float32)],
        ),
        compiler_params=pltpu.CompilerParams(
            dimension_semantics=("arbitrary",)),        # sequential recurrence
    )(tokens, emb, w_fused, b_fused, hidden0)

    hidden_final = outputs[T - 1:T]   # last GRU output == final hidden (1 layer)
    return outputs, hidden_final


def encoder_rnn_forward(token, hidden, prepared):
    """Exact EncoderRNN.forward: one token -> (output (1,1,H), hidden (1,1,H))."""
    tokens = token.reshape((1,)).astype(jnp.int32)
    outputs, hidden_new = encoder_rnn_forward_seq(tokens, hidden, prepared)
    return outputs, hidden_new


def init_params(key, input_size, hidden_size):
    k_emb, k_wih, k_whh, k_bih, k_bhh = jax.random.split(key, 5)
    bound = 1.0 / jnp.sqrt(hidden_size)
    return {
        # nn.Embedding default: N(0, 1)
        "embedding": jax.random.normal(k_emb, (input_size, hidden_size),
                                       dtype=jnp.float32),
        # nn.GRU default: U(-1/sqrt(H), 1/sqrt(H))
        "weight_ih": jax.random.uniform(k_wih, (3 * hidden_size, hidden_size),
                                        minval=-bound, maxval=bound,
                                        dtype=jnp.float32),
        "weight_hh": jax.random.uniform(k_whh, (3 * hidden_size, hidden_size),
                                        minval=-bound, maxval=bound,
                                        dtype=jnp.float32),
        "bias_ih": jax.random.uniform(k_bih, (3 * hidden_size,),
                                      minval=-bound, maxval=bound,
                                      dtype=jnp.float32),
        "bias_hh": jax.random.uniform(k_bhh, (3 * hidden_size,),
                                      minval=-bound, maxval=bound,
                                      dtype=jnp.float32),
    }


def gru_reference_seq(tokens, hidden0, params):
    """Pure-JAX reference (torch.nn.GRU step semantics, scanned over tokens)."""
    emb = params["embedding"]
    w_ih, w_hh = params["weight_ih"], params["weight_hh"]
    b_ih, b_hh = params["bias_ih"], params["bias_hh"]
    H = hidden0.shape[-1]

    def step(h, tok):
        x = emb[tok][None, :]
        gi = x @ w_ih.T + b_ih
        gh = h @ w_hh.T + b_hh
        i_r, i_z, i_n = jnp.split(gi, 3, axis=1)
        h_r, h_z, h_n = jnp.split(gh, 3, axis=1)
        r = jax.nn.sigmoid(i_r + h_r)
        z = jax.nn.sigmoid(i_z + h_z)
        n = jnp.tanh(i_n + r * h_n)
        h_new = (1.0 - z) * n + z * h
        return h_new, h_new

    h_last, outs = jax.lax.scan(step, hidden0.reshape(1, H), tokens)
    return outs.reshape(-1, 1, H), h_last.reshape(1, 1, H)


if __name__ == "__main__":
    VOCAB = 16
    HIDDEN = 256        # matches the module spec; multiple of 128 (lane dense)
    SEQ = 8

    key = jax.random.PRNGKey(0)
    k_params, k_tok = jax.random.split(key)
    params = init_params(k_params, VOCAB, HIDDEN)
    prepared = prepare_params(params)

    tokens = jax.random.randint(k_tok, (SEQ,), 0, VOCAB, dtype=jnp.int32)
    hidden0 = jnp.zeros((1, 1, HIDDEN), dtype=jnp.float32)   # initHidden()

    # Full-sequence encoder pass: T GRU steps inside one pallas_call.
    outputs, hidden_T = encoder_rnn_forward_seq(tokens, hidden0, prepared)
    jax.block_until_ready((outputs, hidden_T))

    # Single-step call matching EncoderRNN.forward exactly.
    out1, hid1 = encoder_rnn_forward(tokens[0:1], hidden0, prepared)
    jax.block_until_ready((out1, hid1))

    # Pure-JAX reference check.
    ref_out, ref_hid = gru_reference_seq(tokens, hidden0, params)

    assert outputs.shape == (SEQ, 1, HIDDEN)
    assert hidden_T.shape == (1, 1, HIDDEN)
    assert jnp.allclose(outputs, ref_out, atol=1e-4, rtol=1e-4)
    assert jnp.allclose(hidden_T, ref_hid, atol=1e-4, rtol=1e-4)
    assert jnp.allclose(out1, ref_out[0:1], atol=1e-4, rtol=1e-4)
    assert jnp.allclose(hid1, ref_out[0:1], atol=1e-4, rtol=1e-4)

    print("KERNEL_OK")
</pallas_src>

<mosaic_0001>
module attributes {stable_mosaic.version = 11 : i64} {
  func.func @_encoder_gru_seq_kernel(%arg0: i32, %arg1: memref<8xi32, #tpu.memory_space<smem>>, %arg2: memref<16x256xf32, #tpu.memory_space<vmem>>, %arg3: memref<512x1024xf32, #tpu.memory_space<vmem>>, %arg4: memref<1x1024xf32, #tpu.memory_space<vmem>>, %arg5: memref<1x1x256xf32, #tpu.memory_space<vmem>>, %arg6: memref<1x1x256xf32, #tpu.memory_space<vmem>>, %arg7: memref<1x256xf32, #tpu.memory_space<vmem>>) attributes {dimension_semantics = [#tpu.dimension_semantics<arbitrary>], iteration_bounds = array<i64: 8>, scalar_prefetch = 1 : i64, scratch_operands = 1 : i64, tpu.core_type = #tpu.core_type<tc>, window_params = [{pipeline_mode = #tpu.pipeline_mode<synchronous>, transform_indices = @transform_0, window_bounds = array<i64: 16, 256>}, {pipeline_mode = #tpu.pipeline_mode<synchronous>, transform_indices = @transform_1, window_bounds = array<i64: 512, 1024>}, {pipeline_mode = #tpu.pipeline_mode<synchronous>, transform_indices = @transform_2, window_bounds = array<i64: 1, 1024>}, {pipeline_mode = #tpu.pipeline_mode<synchronous>, transform_indices = @transform_3, window_bounds = array<i64: 1, 1, 256>}, {transform_indices = @transform_4, window_bounds = array<i64: 1, 1, 256>}]} {
    %c0_i32 = arith.constant 0 : i32
    %0 = arith.cmpi eq, %arg0, %c0_i32 : i32
    %1 = arith.extui %0 : i1 to i32
    %c0_i32_0 = arith.constant 0 : i32
    %2 = arith.cmpi ne, %1, %c0_i32_0 : i32
    scf.if %2 {
      %c0_14 = arith.constant 0 : index
      %c0_15 = arith.constant 0 : index
      %c0_16 = arith.constant 0 : index
      %34 = vector.load %arg5[%c0_14, %c0_15, %c0_16] : memref<1x1x256xf32, #tpu.memory_space<vmem>>, vector<1x1x256xf32>
      %35 = vector.shape_cast %34 : vector<1x1x256xf32> to vector<1x256xf32>
      %c0_17 = arith.constant 0 : index
      %c0_18 = arith.constant 0 : index
      %36 = vector.load %arg7[%c0_17, %c0_18] : memref<1x256xf32, #tpu.memory_space<vmem>>, vector<1x256xf32>
      tpu.vector_store %arg7[%c0_17, %c0_18], %35 {strides = array<i32>} : memref<1x256xf32, #tpu.memory_space<vmem>>, vector<1x256xf32>,
    } else {
    }
    %3 = arith.index_cast %arg0 : i32 to index
    %4 = memref.load %arg1[%3] : memref<8xi32, #tpu.memory_space<smem>>
    %5 = arith.index_cast %4 : i32 to index
    %c0 = arith.constant 0 : index
    %6 = vector.load %arg2[%5, %c0] : memref<16x256xf32, #tpu.memory_space<vmem>>, vector<1x256xf32>
    %c0_1 = arith.constant 0 : index
    %c0_2 = arith.constant 0 : index
    %7 = vector.load %arg7[%c0_1, %c0_2] : memref<1x256xf32, #tpu.memory_space<vmem>>, vector<1x256xf32>
    %8 = tpu.concatenate %6, %7 in 1 : vector<1x256xf32>, vector<1x256xf32> -> vector<1x512xf32>
    %c0_3 = arith.constant 0 : index
    %c0_4 = arith.constant 0 : index
    %9 = vector.load %arg3[%c0_3, %c0_4] : memref<512x1024xf32, #tpu.memory_space<vmem>>, vector<512x1024xf32>
    %cst = arith.constant dense<0.000000e+00> : vector<1x1024xf32>
    %10 = tpu.matmul %8, %9, %cst {dimension_numbers = #tpu.dot_dimension_numbers<[1], [0], [0], [1], [0, 0, 1, 1], [], []>} : vector<1x512xf32>, vector<512x1024xf32>, vector<1x1024xf32> -> vector<1x1024xf32>
    %c0_5 = arith.constant 0 : index
    %c0_6 = arith.constant 0 : index
    %11 = vector.load %arg4[%c0_5, %c0_6] : memref<1x1024xf32, #tpu.memory_space<vmem>>, vector<1x1024xf32>
    %12 = arith.addf %10, %11 : vector<1x1024xf32>
    %13 = vector.extract_strided_slice %12 {offsets = [0, 0], sizes = [1, 512], strides = [1, 1]} : vector<1x1024xf32> to vector<1x512xf32>
    %14 = arith.negf %13 : vector<1x512xf32>
    %15 = math.exp %14 : vector<1x512xf32>
    %cst_7 = arith.constant 1.000000e+00 : f32
    %16 = vector.broadcast %cst_7 : f32 to vector<1x512xf32>
    %17 = arith.addf %16, %15 : vector<1x512xf32>
    %18 = arith.divf %16, %17 : vector<1x512xf32>
    %19 = vector.extract_strided_slice %18 {offsets = [0, 0], sizes = [1, 256], strides = [1, 1]} : vector<1x512xf32> to vector<1x256xf32>
    %20 = vector.extract_strided_slice %18 {offsets = [0, 256], sizes = [1, 256], strides = [1, 1]} : vector<1x512xf32> to vector<1x256xf32>
    %21 = vector.extract_strided_slice %12 {offsets = [0, 512], sizes = [1, 256], strides = [1, 1]} : vector<1x1024xf32> to vector<1x256xf32>
    %22 = vector.extract_strided_slice %12 {offsets = [0, 768], sizes = [1, 256], strides = [1, 1]} : vector<1x1024xf32> to vector<1x256xf32>
    %23 = arith.mulf %19, %22 : vector<1x256xf32>
    %24 = arith.addf %21, %23 : vector<1x256xf32>
    %25 = math.tanh %24 : vector<1x256xf32>
    %cst_8 = arith.constant 1.000000e+00 : f32
    %26 = vector.broadcast %cst_8 : f32 to vector<1x256xf32>
    %27 = arith.subf %26, %20 : vector<1x256xf32>
    %28 = arith.mulf %27, %25 : vector<1x256xf32>
    %29 = arith.mulf %20, %7 : vector<1x256xf32>
    %30 = arith.addf %28, %29 : vector<1x256xf32>
    %c0_9 = arith.constant 0 : index
    %c0_10 = arith.constant 0 : index
    %31 = vector.load %arg7[%c0_9, %c0_10] : memref<1x256xf32, #tpu.memory_space<vmem>>, vector<1x256xf32>
    tpu.vector_store %arg7[%c0_9, %c0_10], %30 {strides = array<i32>} : memref<1x256xf32, #tpu.memory_space<vmem>>, vector<1x256xf32>,
    %32 = vector.shape_cast %30 : vector<1x256xf32> to vector<1x1x256xf32>
    %c0_11 = arith.constant 0 : index
    %c0_12 = arith.constant 0 : index
    %c0_13 = arith.constant 0 : index
    %33 = vector.load %arg6[%c0_11, %c0_12, %c0_13] : memref<1x1x256xf32, #tpu.memory_space<vmem>>, vector<1x1x256xf32>
    tpu.vector_store %arg6[%c0_11, %c0_12, %c0_13], %32 {strides = array<i32>} : memref<1x1x256xf32, #tpu.memory_space<vmem>>, vector<1x1x256xf32>,
    return
  }
  func.func @transform_0(%arg0: i32, %arg1: memref<8xi32, #tpu.memory_space<smem>>) -> (i32, i32) {
    %c0_i32 = arith.constant 0 : i32
    %c0_i32_0 = arith.constant 0 : i32
    %c0_i32_1 = arith.constant 0 : i32
    return %c0_i32, %c0_i32_0 : i32, i32
  }
  func.func @transform_1(%arg0: i32, %arg1: memref<8xi32, #tpu.memory_space<smem>>) -> (i32, i32) {
    %c0_i32 = arith.constant 0 : i32
    %c0_i32_0 = arith.constant 0 : i32
    %c0_i32_1 = arith.constant 0 : i32
    return %c0_i32, %c0_i32_0 : i32, i32
  }
  func.func @transform_2(%arg0: i32, %arg1: memref<8xi32, #tpu.memory_space<smem>>) -> (i32, i32) {
    %c0_i32 = arith.constant 0 : i32
    %c0_i32_0 = arith.constant 0 : i32
    %c0_i32_1 = arith.constant 0 : i32
    return %c0_i32, %c0_i32_0 : i32, i32
  }
  func.func @transform_3(%arg0: i32, %arg1: memref<8xi32, #tpu.memory_space<smem>>) -> (i32, i32, i32) {
    %c0_i32 = arith.constant 0 : i32
    %c0_i32_0 = arith.constant 0 : i32
    %c0_i32_1 = arith.constant 0 : i32
    %c0_i32_2 = arith.constant 0 : i32
    return %c0_i32, %c0_i32_0, %c0_i32_1 : i32, i32, i32
  }
  func.func @transform_4(%arg0: i32, %arg1: memref<8xi32, #tpu.memory_space<smem>>) -> (i32, i32, i32) {
    %c0_i32 = arith.constant 0 : i32
    %c0_i32_0 = arith.constant 0 : i32
    %c0_i32_1 = arith.constant 0 : i32
    return %arg0, %c0_i32, %c0_i32_0 : i32, i32, i32
  }
}

</mosaic_0001>

<llo_original>
// kernel: encoder_rnn_forward_seq.1
$region0: #{encoder_rnn_forward_seq.1}
  #allocation0 [shape = 'u32[]', space=smem, size = 0x4, offset = 0x4, fixed_abs, tag = 'smem constant byte address 0x4 - core index']
  #allocation1 [shape = 'u32[72,128]{1,0:T(1,128)}', space=vmem, size = 0x9000, scoped, tag = 'internal scratch']
  #allocation2 [shape = 'f32[1,256]{1,0:T(1,128)}', space=vmem, size = 0x400, scoped, tag = 'scratch operand']
  #allocation3 [shape = 's32[1]{0}', space=sflag, size = 0x4, scoped, tag = 'scoped memory for encoder_rnn_forward_seq.1']
  #allocation4 [shape = 'u8[512]{0}', space=smem, size = 0x200, scoped, tag = 'prefetched SMEM operand 0']
  %s0 = inlined_call_operand.hbm [shape: s32[8], index: 0, kind: input, shape index: {}]
  %s1 = inlined_call_operand.hbm [shape: f32[16,256], index: 1, kind: input, shape index: {}]
  %s2 = inlined_call_operand.hbm [shape: f32[512,1024], index: 2, kind: input, shape index: {}]
  %s3 = inlined_call_operand.hbm [shape: f32[1,1024], index: 3, kind: input, shape index: {}]
  %s4 = inlined_call_operand.hbm [shape: f32[1,1,256], index: 4, kind: input, shape index: {}]
  %s5 = inlined_call_operand.vmem [shape: f32[8,1,256], index: 5, kind: output, shape index: {}]
  %s6 = sld [smem:[#allocation0]]
  $region69: #{encoder_rnn_forward_seq.1} parent=0
    _
  %s8 = ssub.s32 1, %s6
  %s9 = scalar_select 0, %s8, %s6
  %s11 = sshll.u32 %s0, 4
  %s12 = int_to_ptr.hbm [resolvable:$true] %s11
  %14 = dma.hbm_to_smem %s12, 16, [#allocation4], [#allocation3]
  %16 = dma.done [#allocation3], 16
  %17 = sfence
  $region1: #{encoder_rnn_forward_seq.1} parent=0
    #allocation5 [shape = 'u8[16384]{0}', space=vmem, size = 0x4000, scoped, tag = 'input window, operand 1, single buffered']
    #allocation6 [shape = 's32[2]{0}', space=sflag, size = 0x8, scoped, tag = 'scoped memory for encoder_rnn_forward_seq.1']
    #allocation7 [shape = 'u8[2097152]{0}', space=vmem, size = 0x200000, scoped, tag = 'input window, operand 2, single buffered']
    #allocation8 [shape = 's32[1]{0}', space=sflag, size = 0x4, scoped, tag = 'scoped memory for encoder_rnn_forward_seq.1']
    #allocation9 [shape = 'u8[4096]{0}', space=vmem, size = 0x1000, scoped, tag = 'input window, operand 3, single buffered']
    #allocation10 [shape = 'u8[1024]{0}', space=vmem, size = 0x400, scoped, tag = 'input window, operand 4, single buffered']
    #allocation11 [shape = 's32[1]{0}', space=sflag, size = 0x4, scoped, tag = 'scoped memory for encoder_rnn_forward_seq.1']
    %18 = vsyncpa [#allocation6], 0
    %19 = vsyncpa [#allocation8], 0
    %20 = vsyncpa [#allocation11], 0
    loop: start=0, step=1, limit=10
    $region2: #{encoder_rnn_forward_seq.1} parent=1 // loop_pre_header
      _
    $region3: #{encoder_rnn_forward_seq.1} parent=1 // loop_header
      %s22 = sphi 0, %s26
      %p23 = scmp.ge.s32.totalorder %s22, 10
      %s30 = sphi 0, %s30
      %s32 = sphi 0, %s30
      %s33 = sphi 0, %s32
      %s47 = sphi 0, %s33
      %s51 = sphi 0, %s51
      %s53 = sphi 0, %s51
      %s54 = sphi 0, %s53
      %s68 = sphi 0, %s54
      %s72 = sphi 0, %s72
      %s74 = sphi 0, %s72
      %s75 = sphi 0, %s74
      %s89 = sphi 0, %s75
      %s93 = sphi 0, %s93
      %s95 = sphi 0, %s93
      %s96 = sphi 0, %s95
      %s110 = sphi 0, %s96
      %s116 = sphi 0, %s118
      %s119 = sphi 0, %s116
      %s120 = sphi 0, %s119
      %s136 = sphi 0, %s120
    $region4: #{encoder_rnn_forward_seq.1} parent=1 // loop_header_branch
      %25 = sbr.rel (%p23) target = $region8
    $region5: #{encoder_rnn_forward_seq.1} parent=1 // loop_body
      %s27 = ssub.s32 %s22, 1
      %s28 = ssub.s32 %s22, 2
      %s29 = sadd.s32 %s22, 1
      %s31 = sadd.s32 %s30, 1
      %p34 = scmp.eq.s32.totalorder %s22, 7
      %p35 = scmp.ne.s32.totalorder %s30, %s32
      %p36 = scmp.eq.s32.totalorder %s22, 0
      %p37 = por %p35, %p36
      %p38 = scmp.ne.s32.totalorder %s30, %s32
      %p39 = scmp.eq.s32.totalorder %s27, 7
      %p40 = por %p38, %p39
      %p41 = scmp.ne.s32.totalorder %s32, %s33
      %p42 = scmp.eq.s32.totalorder %s27, 0
      %p43 = por %p41, %p42
      %p44 = scmp.ne.s32.totalorder %s32, %s33
      %p45 = scmp.eq.s32.totalorder %s28, 7
      %p46 = por %p44, %p45
      %p48 = scmp.ne.s32.totalorder %s33, %s47
      %p49 = scmp.eq.s32.totalorder %s28, 0
      %p50 = por %p48, %p49
      %s52 = sadd.s32 %s51, 1
      %p55 = scmp.eq.s32.totalorder %s22, 7
      %p56 = scmp.ne.s32.totalorder %s51, %s53
      %p57 = scmp.eq.s32.totalorder %s22, 0
      %p58 = por %p56, %p57
      %p59 = scmp.ne.s32.totalorder %s51, %s53
      %p60 = scmp.eq.s32.totalorder %s27, 7
      %p61 = por %p59, %p60
      %p62 = scmp.ne.s32.totalorder %s53, %s54
      %p63 = scmp.eq.s32.totalorder %s27, 0
      %p64 = por %p62, %p63
      %p65 = scmp.ne.s32.totalorder %s53, %s54
      %p66 = scmp.eq.s32.totalorder %s28, 7
      %p67 = por %p65, %p66
      %p69 = scmp.ne.s32.totalorder %s54, %s68
      %p70 = scmp.eq.s32.totalorder %s28, 0
      %p71 = por %p69, %p70
      %s73 = sadd.s32 %s72, 1
      %p76 = scmp.eq.s32.totalorder %s22, 7
      %p77 = scmp.ne.s32.totalorder %s72, %s74
      %p78 = scmp.eq.s32.totalorder %s22, 0
      %p79 = por %p77, %p78
      %p80 = scmp.ne.s32.totalorder %s72, %s74
      %p81 = scmp.eq.s32.totalorder %s27, 7
      %p82 = por %p80, %p81
      %p83 = scmp.ne.s32.totalorder %s74, %s75
      %p84 = scmp.eq.s32.totalorder %s27, 0
      %p85 = por %p83, %p84
      %p86 = scmp.ne.s32.totalorder %s74, %s75
      %p87 = scmp.eq.s32.totalorder %s28, 7
      %p88 = por %p86, %p87
      %p90 = scmp.ne.s32.totalorder %s75, %s89
      %p91 = scmp.eq.s32.totalorder %s28, 0
      %p92 = por %p90, %p91
      %s94 = sadd.s32 %s93, 1
      %p97 = scmp.eq.s32.totalorder %s22, 7
      %p98 = scmp.ne.s32.totalorder %s93, %s95
      %p99 = scmp.eq.s32.totalorder %s22, 0
      %p100 = por %p98, %p99
      %p101 = scmp.ne.s32.totalorder %s93, %s95
      %p102 = scmp.eq.s32.totalorder %s27, 7
      %p103 = por %p101, %p102
      %p104 = scmp.ne.s32.totalorder %s95, %s96
      %p105 = scmp.eq.s32.totalorder %s27, 0
      %p106 = por %p104, %p105
      %p107 = scmp.ne.s32.totalorder %s95, %s96
      %p108 = scmp.eq.s32.totalorder %s28, 7
      %p109 = por %p107, %p108
      %p111 = scmp.ne.s32.totalorder %s96, %s110
      %p112 = scmp.eq.s32.totalorder %s28, 0
      %p113 = por %p111, %p112
      %s114 = ssub.s32 %s22, %s29
      %p115 = scmp.eq.s32.totalorder %s114, 0
      %s117 = sadd.s32 %s116, 1
      %s118 = scalar_select %p115, %s116, %s117
      %p121 = pneg %p115
      %p122 = scmp.eq.s32.totalorder %s22, 7
      %p123 = por %p121, %p122
      %p124 = scmp.ne.s32.totalorder %s116, %s119
      %p125 = scmp.eq.s32.totalorder %s22, 0
      %p126 = por %p124, %p125
      %p127 = scmp.ne.s32.totalorder %s116, %s119
      %p128 = scmp.eq.s32.totalorder %s27, 7
      %p129 = por %p127, %p128
      %p130 = scmp.ne.s32.totalorder %s119, %s120
      %p131 = scmp.eq.s32.totalorder %s27, 0
      %p132 = por %p130, %p131
      %p133 = scmp.ne.s32.totalorder %s119, %s120
      %p134 = scmp.eq.s32.totalorder %s28, 7
      %p135 = por %p133, %p134
      %p137 = scmp.ne.s32.totalorder %s120, %s136
      %p138 = scmp.eq.s32.totalorder %s28, 0
      %p139 = por %p137, %p138
      %p140 = scmp.le.s32.totalorder 1, %s22
      %p141 = scmp.lt.s32.totalorder %s22, 9
      %p142 = pnand %p140, %p141
      %p143 = pneg %p142
      // Predicated region
      $region9: #{encoder_rnn_forward_seq.1} parent=5 // pred_check
        _
      $region10: #{encoder_rnn_forward_seq.1} parent=5 // pred_check_branch
        %145 = sbr.rel (%p142) target = $region12
      $region11: #{encoder_rnn_forward_seq.1} parent=5 // pred_region
        %s146 = ssub.s32 %s22, 1
        // Predicated region
        $region13: #{encoder_rnn_forward_seq.1} parent=11 // pred_check
          %p147 = pneg %p43
        $region14: #{encoder_rnn_forward_seq.1} parent=11 // pred_check_branch
          %149 = sbr.rel (%p147) target = $region16
        $region15: #{encoder_rnn_forward_seq.1} parent=11 // pred_region
          %151 = vsyncadd [#allocation6], 0
          %s152 = sshll.u32 %s1, 4
          %s153 = int_to_ptr.hbm [resolvable:$true] %s152
          %s154 = sshll.u32 [#allocation5], 4
          %s155 = int_to_ptr.vmem [resolvable:$true] %s154
          %160 = dma.hbm_to_vmem [thread:$0]  %s153, 512, %s155, [#allocation6], 256, 256, 16
        $region16: #{encoder_rnn_forward_seq.1} parent=11 // pred_fallthru
          _
        // Predicated region
        $region17: #{encoder_rnn_forward_seq.1} parent=11 // pred_check
          %p161 = pneg %p64
        $region18: #{encoder_rnn_forward_seq.1} parent=11 // pred_check_branch
          %163 = sbr.rel (%p161) target = $region20
        $region19: #{encoder_rnn_forward_seq.1} parent=11 // pred_region
          %165 = vsyncadd [#allocation8], 0
          %s166 = sshll.u32 %s2, 4
          %s167 = int_to_ptr.hbm [resolvable:$true] %s166
          %s168 = sshll.u32 [#allocation7], 4
          %s169 = int_to_ptr.vmem [resolvable:$true] %s168
          %174 = dma.hbm_to_vmem [thread:$0]  %s167, 65536, %s169, [#allocation8], 1024, 1024, 64
        $region20: #{encoder_rnn_forward_seq.1} parent=11 // pred_fallthru
          _
        // Predicated region
        $region21: #{encoder_rnn_forward_seq.1} parent=11 // pred_check
          %p175 = pneg %p85
        $region22: #{encoder_rnn_forward_seq.1} parent=11 // pred_check_branch
          %177 = sbr.rel (%p175) target = $region24
        $region23: #{encoder_rnn_forward_seq.1} parent=11 // pred_region
          %179 = vsyncadd [#allocation8], 0
          %s181 = sshll.u32 %s3, 4
          %s182 = int_to_ptr.hbm [resolvable:$true] %s181
          %s183 = sshll.u32 [#allocation9], 4
          %s184 = int_to_ptr.vmem [resolvable:$true] %s183
          %186 = dma.hbm_to_vmem [thread:$0]  %s182, 128, %s184, [#allocation8]
        $region24: #{encoder_rnn_forward_seq.1} parent=11 // pred_fallthru
          _
        // Predicated region
        $region25: #{encoder_rnn_forward_seq.1} parent=11 // pred_check
          %p187 = pneg %p106
        $region26: #{encoder_rnn_forward_seq.1} parent=11 // pred_check_branch
          %189 = sbr.rel (%p187) target = $region28
        $region27: #{encoder_rnn_forward_seq.1} parent=11 // pred_region
          %191 = vsyncadd [#allocation11], 0
          %s193 = sshll.u32 %s4, 4
          %s194 = int_to_ptr.hbm [resolvable:$true] %s193
          %s195 = sshll.u32 [#allocation10], 4
          %s196 = int_to_ptr.vmem [resolvable:$true] %s195
          %198 = dma.hbm_to_vmem [thread:$0]  %s194, 32, %s196, [#allocation11]
        $region28: #{encoder_rnn_forward_seq.1} parent=11 // pred_fallthru
          _
      $region12: #{encoder_rnn_forward_seq.1} parent=5 // pred_fallthru
        _
      %p199 = scmp.lt.s32.totalorder %s22, 8
      // Predicated region
      $region29: #{encoder_rnn_forward_seq.1} parent=5 // pred_check
        %p200 = pneg %p199
      $region30: #{encoder_rnn_forward_seq.1} parent=5 // pred_check_branch
        %202 = sbr.rel (%p200) target = $region32
      $region31: #{encoder_rnn_forward_seq.1} parent=5 // pred_region
        _
      $region32: #{encoder_rnn_forward_seq.1} parent=5 // pred_fallthru
        _
      %p203 = scmp.le.s32.totalorder 1, %s22
      %p204 = scmp.lt.s32.totalorder %s22, 9
      %p205 = pnand %p203, %p204
      %p206 = pneg %p205
      // Predicated region
      $region33: #{encoder_rnn_forward_seq.1} parent=5 // pred_check
        _
      $region34: #{encoder_rnn_forward_seq.1} parent=5 // pred_check_branch
        %208 = sbr.rel (%p205) target = $region36
      $region35: #{encoder_rnn_forward_seq.1} parent=5 // pred_region
        %s209 = ssub.s32 %s22, 1
        // Predicated region
        $region37: #{encoder_rnn_forward_seq.1} parent=35 // pred_check
          %p210 = pneg %p43
        $region38: #{encoder_rnn_forward_seq.1} parent=35 // pred_check_branch
          %212 = sbr.rel (%p210) target = $region40
        $region39: #{encoder_rnn_forward_seq.1} parent=35 // pred_region
          %214 = dma.done [#allocation6], 512
        $region40: #{encoder_rnn_forward_seq.1} parent=35 // pred_fallthru
          _
        // Predicated region
        $region41: #{encoder_rnn_forward_seq.1} parent=35 // pred_check
          %p215 = pneg %p64
        $region42: #{encoder_rnn_forward_seq.1} parent=35 // pred_check_branch
          %217 = sbr.rel (%p215) target = $region44
        $region43: #{encoder_rnn_forward_seq.1} parent=35 // pred_region
          %219 = dma.done [#allocation8], 65536
        $region44: #{encoder_rnn_forward_seq.1} parent=35 // pred_fallthru
          _
        // Predicated region
        $region45: #{encoder_rnn_forward_seq.1} parent=35 // pred_check
          %p220 = pneg %p85
        $region46: #{encoder_rnn_forward_seq.1} parent=35 // pred_check_branch
          %222 = sbr.rel (%p220) target = $region48
        $region47: #{encoder_rnn_forward_seq.1} parent=35 // pred_region
          %224 = dma.done [#allocation8], 128
        $region48: #{encoder_rnn_forward_seq.1} parent=35 // pred_fallthru
          _
        // Predicated region
        $region49: #{encoder_rnn_forward_seq.1} parent=35 // pred_check
          %p225 = pneg %p106
        $region50: #{encoder_rnn_forward_seq.1} parent=35 // pred_check_branch
          %227 = sbr.rel (%p225) target = $region52
        $region51: #{encoder_rnn_forward_seq.1} parent=35 // pred_region
          %229 = dma.done [#allocation11], 32
        $region52: #{encoder_rnn_forward_seq.1} parent=35 // pred_fallthru
          _
        %p230 = pneg %p43
        %p231 = pneg %p40
        %p232 = pneg %p64
        %p233 = pneg %p61
        %p234 = pneg %p85
        %p235 = pneg %p82
        %p236 = pneg %p106
        %p237 = pneg %p103
        %p238 = pneg %p132
        %p239 = pneg %p129
        %p240 = scmp.lt.s32.totalorder %s27, 7
        %s241 = scalar_select %p240, %s27, 7
        %s242 = smul.addr %s241, 2
        %s243 = scalar_lea.vmem %s5, %s242
        %p244 = scmp.lt.s32.totalorder %s27, 7
        %s245 = scalar_select %p244, %s27, 7
        %s246 = smul.addr %s245, 2
        %s247 = scalar_lea.vmem %s5, %s246
        %p248 = scmp.eq.s32.totalorder %s27, 0
        // Predicated region
        $region53: #{encoder_rnn_forward_seq.1} parent=35 // pred_check
          %p249 = pneg %p248
        $region54: #{encoder_rnn_forward_seq.1} parent=35 // pred_check_branch
          %251 = sbr.rel (%p249) target = $region56
        $region55: #{encoder_rnn_forward_seq.1} parent=35 // pred_region
          %v252 = vld [vmem:[#allocation10] sm:$0x3]
          %v253 = vlaneseq
          %vm254 = vcmp.ge.s32.totalorder %v253, 0
          %vm255 = vcmp.lt.s32.totalorder %v253, 256
          %vm256 = vmand %vm254, %vm255
          %257 = vst.msk [vmem:[#allocation2] sm:$0x3] %vm256, %v252
        $region56: #{encoder_rnn_forward_seq.1} parent=35 // pred_fallthru
          _
        %s258 = sld [smem:[#allocation4 + %s27]]
        %s259 = sshra.s32 %s258, 3
        %s260 = sand.u32 %s258, 7
        %s261 = sshra.s32 %s258, 3
        %s262 = sand.u32 %s258, 7
        %s263 = smul.u32 %s259, 2
        %s264 = smul.u32 %s263, 8
        %s265 = sadd.s32 %s264, %s262
        %s266 = scalar_lea.vmem [#allocation5], %s265
        %v267 = vld [vmem:[%s266] ss:$8 sm:$0x3]
        %v268 = vld [vmem:[#allocation2] sm:$0x3]
        %v270 = vperm.slane %v267, 0
        %v271 = vperm.slane %v267, 1
        %v275 = vperm.slane %v268, 0
        %v276 = vperm.slane %v268, 1
        %v279 = vld [vmem:[#allocation7] sm:$0xff]
        %v280 = vld [vmem:[#allocation7 + $0x8] sm:$0xff]
        %v281 = vld [vmem:[#allocation7 + $0x10] sm:$0xff]
        %v282 = vld [vmem:[#allocation7 + $0x18] sm:$0xff]
        %v283 = vld [vmem:[#allocation7 + $0x20] sm:$0xff]
        %v284 = vld [vmem:[#allocation7 + $0x28] sm:$0xff]
        %v285 = vld [vmem:[#allocation7 + $0x30] sm:$0xff]
        %v286 = vld [vmem:[#allocation7 + $0x38] sm:$0xff]
        %v287 = vld [vmem:[#allocation7 + $0x40] sm:$0xff]
        %v288 = vld [vmem:[#allocation7 + $0x48] sm:$0xff]
        %v289 = vld [vmem:[#allocation7 + $0x50] sm:$0xff]
        %v290 = vld [vmem:[#allocation7 + $0x58] sm:$0xff]
        %v291 = vld [vmem:[#allocation7 + $0x60] sm:$0xff]
        %v292 = vld [vmem:[#allocation7 + $0x68] sm:$0xff]
        %v293 = vld [vmem:[#allocation7 + $0x70] sm:$0xff]
        %v294 = vld [vmem:[#allocation7 + $0x78] sm:$0xff]
        %v295 = vld [vmem:[#allocation7 + $0x80] sm:$0xff]
        %v296 = vld [vmem:[#allocation7 + $0x88] sm:$0xff]
        %v297 = vld [vmem:[#allocation7 + $0x90] sm:$0xff]
        %v298 = vld [vmem:[#allocation7 + $0x98] sm:$0xff]
        %v299 = vld [vmem:[#allocation7 + $0xa0] sm:$0xff]
        %v300 = vld [vmem:[#allocation7 + $0xa8] sm:$0xff]
        %v301 = vld [vmem:[#allocation7 + $0xb0] sm:$0xff]
        %v302 = vld [vmem:[#allocation7 + $0xb8] sm:$0xff]
        %v303 = vld [vmem:[#allocation7 + $0xc0] sm:$0xff]
        %v304 = vld [vmem:[#allocation7 + $0xc8] sm:$0xff]
        %v305 = vld [vmem:[#allocation7 + $0xd0] sm:$0xff]
        %v306 = vld [vmem:[#allocation7 + $0xd8] sm:$0xff]
        %v307 = vld [vmem:[#allocation7 + $0xe0] sm:$0xff]
        %v308 = vld [vmem:[#allocation7 + $0xe8] sm:$0xff]
        %v309 = vld [vmem:[#allocation7 + $0xf0] sm:$0xff]
        %v310 = vld [vmem:[#allocation7 + $0xf8] sm:$0xff]
        %v311 = vld [vmem:[#allocation7 + $0x100] sm:$0xff]
        %v312 = vld [vmem:[#allocation7 + $0x108] sm:$0xff]
        %v313 = vld [vmem:[#allocation7 + $0x110] sm:$0xff]
        %v314 = vld [vmem:[#allocation7 + $0x118] sm:$0xff]
        %v315 = vld [vmem:[#allocation7 + $0x120] sm:$0xff]
        %v316 = vld [vmem:[#allocation7 + $0x128] sm:$0xff]
        %v317 = vld [vmem:[#allocation7 + $0x130] sm:$0xff]
        %v318 = vld [vmem:[#allocation7 + $0x138] sm:$0xff]
        %v319 = vld [vmem:[#allocation7 + $0x140] sm:$0xff]
        %v320 = vld [vmem:[#allocation7 + $0x148] sm:$0xff]
        %v321 = vld [vmem:[#allocation7 + $0x150] sm:$0xff]
        %v322 = vld [vmem:[#allocation7 + $0x158] sm:$0xff]
        %v323 = vld [vmem:[#allocation7 + $0x160] sm:$0xff]
        %v324 = vld [vmem:[#allocation7 + $0x168] sm:$0xff]
        %v325 = vld [vmem:[#allocation7 + $0x170] sm:$0xff]
        %v326 = vld [vmem:[#allocation7 + $0x178] sm:$0xff]
        %v327 = vld [vmem:[#allocation7 + $0x180] sm:$0xff]
        %v328 = vld [vmem:[#allocation7 + $0x188] sm:$0xff]
        %v329 = vld [vmem:[#allocation7 + $0x190] sm:$0xff]
        %v330 = vld [vmem:[#allocation7 + $0x198] sm:$0xff]
        %v331 = vld [vmem:[#allocation7 + $0x1a0] sm:$0xff]
        %v332 = vld [vmem:[#allocation7 + $0x1a8] sm:$0xff]
        %v333 = vld [vmem:[#allocation7 + $0x1b0] sm:$0xff]
        %v334 = vld [vmem:[#allocation7 + $0x1b8] sm:$0xff]
        %v335 = vld [vmem:[#allocation7 + $0x1c0] sm:$0xff]
        %v336 = vld [vmem:[#allocation7 + $0x1c8] sm:$0xff]
        %v337 = vld [vmem:[#allocation7 + $0x1d0] sm:$0xff]
        %v338 = vld [vmem:[#allocation7 + $0x1d8] sm:$0xff]
        %v339 = vld [vmem:[#allocation7 + $0x1e0] sm:$0xff]
        %v340 = vld [vmem:[#allocation7 + $0x1e8] sm:$0xff]
        %v341 = vld [vmem:[#allocation7 + $0x1f0] sm:$0xff]
        %v342 = vld [vmem:[#allocation7 + $0x1f8] sm:$0xff]
        %v343 = vld [vmem:[#allocation7 + $0x200] sm:$0xff]
        %v344 = vld [vmem:[#allocation7 + $0x208] sm:$0xff]
        %v345 = vld [vmem:[#allocation7 + $0x210] sm:$0xff]
        %v346 = vld [vmem:[#allocation7 + $0x218] sm:$0xff]
        %v347 = vld [vmem:[#allocation7 + $0x220] sm:$0xff]
        %v348 = vld [vmem:[#allocation7 + $0x228] sm:$0xff]
        %v349 = vld [vmem:[#allocation7 + $0x230] sm:$0xff]
        %v350 = vld [vmem:[#allocation7 + $0x238] sm:$0xff]
        %v351 = vld [vmem:[#allocation7 + $0x240] sm:$0xff]
        %v352 = vld [vmem:[#allocation7 + $0x248] sm:$0xff]
        %v353 = vld [vmem:[#allocation7 + $0x250] sm:$0xff]
        %v354 = vld [vmem:[#allocation7 + $0x258] sm:$0xff]
        %v355 = vld [vmem:[#allocation7 + $0x260] sm:$0xff]
        %v356 = vld [vmem:[#allocation7 + $0x268] sm:$0xff]
        %v357 = vld [vmem:[#allocation7 + $0x270] sm:$0xff]
        %v358 = vld [vmem:[#allocation7 + $0x278] sm:$0xff]
        %v359 = vld [vmem:[#allocation7 + $0x280] sm:$0xff]
        %v360 = vld [vmem:[#allocation7 + $0x288] sm:$0xff]
        %v361 = vld [vmem:[#allocation7 + $0x290] sm:$0xff]
        %v362 = vld [vmem:[#allocation7 + $0x298] sm:$0xff]
        %v363 = vld [vmem:[#allocation7 + $0x2a0] sm:$0xff]
        %v364 = vld [vmem:[#allocation7 + $0x2a8] sm:$0xff]
        %v365 = vld [vmem:[#allocation7 + $0x2b0] sm:$0xff]
        %v366 = vld [vmem:[#allocation7 + $0x2b8] sm:$0xff]
        %v367 = vld [vmem:[#allocation7 + $0x2c0] sm:$0xff]
        %v368 = vld [vmem:[#allocation7 + $0x2c8] sm:$0xff]
        %v369 = vld [vmem:[#allocation7 + $0x2d0] sm:$0xff]
        %v370 = vld [vmem:[#allocation7 + $0x2d8] sm:$0xff]
        %v371 = vld [vmem:[#allocation7 + $0x2e0] sm:$0xff]
        %v372 = vld [vmem:[#allocation7 + $0x2e8] sm:$0xff]
        %v373 = vld [vmem:[#allocation7 + $0x2f0] sm:$0xff]
        %v374 = vld [vmem:[#allocation7 + $0x2f8] sm:$0xff]
        %v375 = vld [vmem:[#allocation7 + $0x300] sm:$0xff]
        %v376 = vld [vmem:[#allocation7 + $0x308] sm:$0xff]
        %v377 = vld [vmem:[#allocation7 + $0x310] sm:$0xff]
        %v378 = vld [vmem:[#allocation7 + $0x318] sm:$0xff]
        %v379 = vld [vmem:[#allocation7 + $0x320] sm:$0xff]
        %v380 = vld [vmem:[#allocation7 + $0x328] sm:$0xff]
        %v381 = vld [vmem:[#allocation7 + $0x330] sm:$0xff]
        %v382 = vld [vmem:[#allocation7 + $0x338] sm:$0xff]
        %v383 = vld [vmem:[#allocation7 + $0x340] sm:$0xff]
        %v384 = vld [vmem:[#allocation7 + $0x348] sm:$0xff]
        %v385 = vld [vmem:[#allocation7 + $0x350] sm:$0xff]
        %v386 = vld [vmem:[#allocation7 + $0x358] sm:$0xff]
        %v387 = vld [vmem:[#allocation7 + $0x360] sm:$0xff]
        %v388 = vld [vmem:[#allocation7 + $0x368] sm:$0xff]
        %v389 = vld [vmem:[#allocation7 + $0x370] sm:$0xff]
        %v390 = vld [vmem:[#allocation7 + $0x378] sm:$0xff]
        %v391 = vld [vmem:[#allocation7 + $0x380] sm:$0xff]
        %v392 = vld [vmem:[#allocation7 + $0x388] sm:$0xff]
        %v393 = vld [vmem:[#allocation7 + $0x390] sm:$0xff]
        %v394 = vld [vmem:[#allocation7 + $0x398] sm:$0xff]
        %v395 = vld [vmem:[#allocation7 + $0x3a0] sm:$0xff]
        %v396 = vld [vmem:[#allocation7 + $0x3a8] sm:$0xff]
        %v397 = vld [vmem:[#allocation7 + $0x3b0] sm:$0xff]
        %v398 = vld [vmem:[#allocation7 + $0x3b8] sm:$0xff]
        %v399 = vld [vmem:[#allocation7 + $0x3c0] sm:$0xff]
        %v400 = vld [vmem:[#allocation7 + $0x3c8] sm:$0xff]
        %v401 = vld [vmem:[#allocation7 + $0x3d0] sm:$0xff]
        %v402 = vld [vmem:[#allocation7 + $0x3d8] sm:$0xff]
        %v403 = vld [vmem:[#allocation7 + $0x3e0] sm:$0xff]
        %v404 = vld [vmem:[#allocation7 + $0x3e8] sm:$0xff]
        %v405 = vld [vmem:[#allocation7 + $0x3f0] sm:$0xff]
        %v406 = vld [vmem:[#allocation7 + $0x3f8] sm:$0xff]
        %v407 = vld [vmem:[#allocation7 + $0x400] sm:$0xff]
        %v408 = vld [vmem:[#allocation7 + $0x408] sm:$0xff]
        %v409 = vld [vmem:[#allocation7 + $0x410] sm:$0xff]
        %v410 = vld [vmem:[#allocation7 + $0x418] sm:$0xff]
        %v411 = vld [vmem:[#allocation7 + $0x420] sm:$0xff]
        %v412 = vld [vmem:[#allocation7 + $0x428] sm:$0xff]
        %v413 = vld [vmem:[#allocation7 + $0x430] sm:$0xff]
        %v414 = vld [vmem:[#allocation7 + $0x438] sm:$0xff]
        %v415 = vld [vmem:[#allocation7 + $0x440] sm:$0xff]
        %v416 = vld [vmem:[#allocation7 + $0x448] sm:$0xff]
        %v417 = vld [vmem:[#allocation7 + $0x450] sm:$0xff]
        %v418 = vld [vmem:[#allocation7 + $0x458] sm:$0xff]
        %v419 = vld [vmem:[#allocation7 + $0x460] sm:$0xff]
        %v420 = vld [vmem:[#allocation7 + $0x468] sm:$0xff]
        %v421 = vld [vmem:[#allocation7 + $0x470] sm:$0xff]
        %v422 = vld [vmem:[#allocation7 + $0x478] sm:$0xff]
        %v423 = vld [vmem:[#allocation7 + $0x480] sm:$0xff]
        %v424 = vld [vmem:[#allocation7 + $0x488] sm:$0xff]
        %v425 = vld [vmem:[#allocation7 + $0x490] sm:$0xff]
        %v426 = vld [vmem:[#allocation7 + $0x498] sm:$0xff]
        %v427 = vld [vmem:[#allocation7 + $0x4a0] sm:$0xff]
        %v428 = vld [vmem:[#allocation7 + $0x4a8] sm:$0xff]
        %v429 = vld [vmem:[#allocation7 + $0x4b0] sm:$0xff]
        %v430 = vld [vmem:[#allocation7 + $0x4b8] sm:$0xff]
        %v431 = vld [vmem:[#allocation7 + $0x4c0] sm:$0xff]
        %v432 = vld [vmem:[#allocation7 + $0x4c8] sm:$0xff]
        %v433 = vld [vmem:[#allocation7 + $0x4d0] sm:$0xff]
        %v434 = vld [vmem:[#allocation7 + $0x4d8] sm:$0xff]
        %v435 = vld [vmem:[#allocation7 + $0x4e0] sm:$0xff]
        %v436 = vld [vmem:[#allocation7 + $0x4e8] sm:$0xff]
        %v437 = vld [vmem:[#allocation7 + $0x4f0] sm:$0xff]
        %v438 = vld [vmem:[#allocation7 + $0x4f8] sm:$0xff]
        %v439 = vld [vmem:[#allocation7 + $0x500] sm:$0xff]
        %v440 = vld [vmem:[#allocation7 + $0x508] sm:$0xff]
        %v441 = vld [vmem:[#allocation7 + $0x510] sm:$0xff]
        %v442 = vld [vmem:[#allocation7 + $0x518] sm:$0xff]
        %v443 = vld [vmem:[#allocation7 + $0x520] sm:$0xff]
        %v444 = vld [vmem:[#allocation7 + $0x528] sm:$0xff]
        %v445 = vld [vmem:[#allocation7 + $0x530] sm:$0xff]
        %v446 = vld [vmem:[#allocation7 + $0x538] sm:$0xff]
        %v447 = vld [vmem:[#allocation7 + $0x540] sm:$0xff]
        %v448 = vld [vmem:[#allocation7 + $0x548] sm:$0xff]
        %v449 = vld [vmem:[#allocation7 + $0x550] sm:$0xff]
        %v450 = vld [vmem:[#allocation7 + $0x558] sm:$0xff]
        %v451 = vld [vmem:[#allocation7 + $0x560] sm:$0xff]
        %v452 = vld [vmem:[#allocation7 + $0x568] sm:$0xff]
        %v453 = vld [vmem:[#allocation7 + $0x570] sm:$0xff]
        %v454 = vld [vmem:[#allocation7 + $0x578] sm:$0xff]
        %v455 = vld [vmem:[#allocation7 + $0x580] sm:$0xff]
        %v456 = vld [vmem:[#allocation7 + $0x588] sm:$0xff]
        %v457 = vld [vmem:[#allocation7 + $0x590] sm:$0xff]
        %v458 = vld [vmem:[#allocation7 + $0x598] sm:$0xff]
        %v459 = vld [vmem:[#allocation7 + $0x5a0] sm:$0xff]
        %v460 = vld [vmem:[#allocation7 + $0x5a8] sm:$0xff]
        %v461 = vld [vmem:[#allocation7 + $0x5b0] sm:$0xff]
        %v462 = vld [vmem:[#allocation7 + $0x5b8] sm:$0xff]
        %v463 = vld [vmem:[#allocation7 + $0x5c0] sm:$0xff]
        %v464 = vld [vmem:[#allocation7 + $0x5c8] sm:$0xff]
        %v465 = vld [vmem:[#allocation7 + $0x5d0] sm:$0xff]
        %v466 = vld [vmem:[#allocation7 + $0x5d8] sm:$0xff]
        %v467 = vld [vmem:[#allocation7 + $0x5e0] sm:$0xff]
        %v468 = vld [vmem:[#allocation7 + $0x5e8] sm:$0xff]
        %v469 = vld [vmem:[#allocation7 + $0x5f0] sm:$0xff]
        %v470 = vld [vmem:[#allocation7 + $0x5f8] sm:$0xff]
        %v471 = vld [vmem:[#allocation7 + $0x600] sm:$0xff]
        %v472 = vld [vmem:[#allocation7 + $0x608] sm:$0xff]
        %v473 = vld [vmem:[#allocation7 + $0x610] sm:$0xff]
        %v474 = vld [vmem:[#allocation7 + $0x618] sm:$0xff]
        %v475 = vld [vmem:[#allocation7 + $0x620] sm:$0xff]
        %v476 = vld [vmem:[#allocation7 + $0x628] sm:$0xff]
        %v477 = vld [vmem:[#allocation7 + $0x630] sm:$0xff]
        %v478 = vld [vmem:[#allocation7 + $0x638] sm:$0xff]
        %v479 = vld [vmem:[#allocation7 + $0x640] sm:$0xff]
        %v480 = vld [vmem:[#allocation7 + $0x648] sm:$0xff]
        %v481 = vld [vmem:[#allocation7 + $0x650] sm:$0xff]
        %v482 = vld [vmem:[#allocation7 + $0x658] sm:$0xff]
        %v483 = vld [vmem:[#allocation7 + $0x660] sm:$0xff]
        %v484 = vld [vmem:[#allocation7 + $0x668] sm:$0xff]
        %v485 = vld [vmem:[#allocation7 + $0x670] sm:$0xff]
        %v486 = vld [vmem:[#allocation7 + $0x678] sm:$0xff]
        %v487 = vld [vmem:[#allocation7 + $0x680] sm:$0xff]
        %v488 = vld [vmem:[#allocation7 + $0x688] sm:$0xff]
        %v489 = vld [vmem:[#allocation7 + $0x690] sm:$0xff]
        %v490 = vld [vmem:[#allocation7 + $0x698] sm:$0xff]
        %v491 = vld [vmem:[#allocation7 + $0x6a0] sm:$0xff]
        %v492 = vld [vmem:[#allocation7 + $0x6a8] sm:$0xff]
        %v493 = vld [vmem:[#allocation7 + $0x6b0] sm:$0xff]
        %v494 = vld [vmem:[#allocation7 + $0x6b8] sm:$0xff]
        %v495 = vld [vmem:[#allocation7 + $0x6c0] sm:$0xff]
        %v496 = vld [vmem:[#allocation7 + $0x6c8] sm:$0xff]
        %v497 = vld [vmem:[#allocation7 + $0x6d0] sm:$0xff]
        %v498 = vld [vmem:[#allocation7 + $0x6d8] sm:$0xff]
        %v499 = vld [vmem:[#allocation7 + $0x6e0] sm:$0xff]
        %v500 = vld [vmem:[#allocation7 + $0x6e8] sm:$0xff]
        %v501 = vld [vmem:[#allocation7 + $0x6f0] sm:$0xff]
        %v502 = vld [vmem:[#allocation7 + $0x6f8] sm:$0xff]
        %v503 = vld [vmem:[#allocation7 + $0x700] sm:$0xff]
        %v504 = vld [vmem:[#allocation7 + $0x708] sm:$0xff]
        %v505 = vld [vmem:[#allocation7 + $0x710] sm:$0xff]
        %v506 = vld [vmem:[#allocation7 + $0x718] sm:$0xff]
        %v507 = vld [vmem:[#allocation7 + $0x720] sm:$0xff]
        %v508 = vld [vmem:[#allocation7 + $0x728] sm:$0xff]
        %v509 = vld [vmem:[#allocation7 + $0x730] sm:$0xff]
        %v510 = vld [vmem:[#allocation7 + $0x738] sm:$0xff]
        %v511 = vld [vmem:[#allocation7 + $0x740] sm:$0xff]
        %v512 = vld [vmem:[#allocation7 + $0x748] sm:$0xff]
        %v513 = vld [vmem:[#allocation7 + $0x750] sm:$0xff]
        %v514 = vld [vmem:[#allocation7 + $0x758] sm:$0xff]
        %v515 = vld [vmem:[#allocation7 + $0x760] sm:$0xff]
        %v516 = vld [vmem:[#allocation7 + $0x768] sm:$0xff]
        %v517 = vld [vmem:[#allocation7 + $0x770] sm:$0xff]
        %v518 = vld [vmem:[#allocation7 + $0x778] sm:$0xff]
        %v519 = vld [vmem:[#allocation7 + $0x780] sm:$0xff]
        %v520 = vld [vmem:[#allocation7 + $0x788] sm:$0xff]
        %v521 = vld [vmem:[#allocation7 + $0x790] sm:$0xff]
        %v522 = vld [vmem:[#allocation7 + $0x798] sm:$0xff]
        %v523 = vld [vmem:[#allocation7 + $0x7a0] sm:$0xff]
        %v524 = vld [vmem:[#allocation7 + $0x7a8] sm:$0xff]
        %v525 = vld [vmem:[#allocation7 + $0x7b0] sm:$0xff]
        %v526 = vld [vmem:[#allocation7 + $0x7b8] sm:$0xff]
        %v527 = vld [vmem:[#allocation7 + $0x7c0] sm:$0xff]
        %v528 = vld [vmem:[#allocation7 + $0x7c8] sm:$0xff]
        %v529 = vld [vmem:[#allocation7 + $0x7d0] sm:$0xff]
        %v530 = vld [vmem:[#allocation7 + $0x7d8] sm:$0xff]
        %v531 = vld [vmem:[#allocation7 + $0x7e0] sm:$0xff]
        %v532 = vld [vmem:[#allocation7 + $0x7e8] sm:$0xff]
        %v533 = vld [vmem:[#allocation7 + $0x7f0] sm:$0xff]
        %v534 = vld [vmem:[#allocation7 + $0x7f8] sm:$0xff]
        %v535 = vld [vmem:[#allocation7 + $0x800] sm:$0xff]
        %v536 = vld [vmem:[#allocation7 + $0x808] sm:$0xff]
        %v537 = vld [vmem:[#allocation7 + $0x810] sm:$0xff]
        %v538 = vld [vmem:[#allocation7 + $0x818] sm:$0xff]
        %v539 = vld [vmem:[#allocation7 + $0x820] sm:$0xff]
        %v540 = vld [vmem:[#allocation7 + $0x828] sm:$0xff]
        %v541 = vld [vmem:[#allocation7 + $0x830] sm:$0xff]
        %v542 = vld [vmem:[#allocation7 + $0x838] sm:$0xff]
        %v543 = vld [vmem:[#allocation7 + $0x840] sm:$0xff]
        %v544 = vld [vmem:[#allocation7 + $0x848] sm:$0xff]
        %v545 = vld [vmem:[#allocation7 + $0x850] sm:$0xff]
        %v546 = vld [vmem:[#allocation7 + $0x858] sm:$0xff]
        %v547 = vld [vmem:[#allocation7 + $0x860] sm:$0xff]
        %v548 = vld [vmem:[#allocation7 + $0x868] sm:$0xff]
        %v549 = vld [vmem:[#allocation7 + $0x870] sm:$0xff]
        %v550 = vld [vmem:[#allocation7 + $0x878] sm:$0xff]
        %v551 = vld [vmem:[#allocation7 + $0x880] sm:$0xff]
        %v552 = vld [vmem:[#allocation7 + $0x888] sm:$0xff]
        %v553 = vld [vmem:[#allocation7 + $0x890] sm:$0xff]
        %v554 = vld [vmem:[#allocation7 + $0x898] sm:$0xff]
        %v555 = vld [vmem:[#allocation7 + $0x8a0] sm:$0xff]
        %v556 = vld [vmem:[#allocation7 + $0x8a8] sm:$0xff]
        %v557 = vld [vmem:[#allocation7 + $0x8b0] sm:$0xff]
        %v558 = vld [vmem:[#allocation7 + $0x8b8] sm:$0xff]
        %v559 = vld [vmem:[#allocation7 + $0x8c0] sm:$0xff]
        %v560 = vld [vmem:[#allocation7 + $0x8c8] sm:$0xff]
        %v561 = vld [vmem:[#allocation7 + $0x8d0] sm:$0xff]
        %v562 = vld [vmem:[#allocation7 + $0x8d8] sm:$0xff]
        %v563 = vld [vmem:[#allocation7 + $0x8e0] sm:$0xff]
        %v564 = vld [vmem:[#allocation7 + $0x8e8] sm:$0xff]
        %v565 = vld [vmem:[#allocation7 + $0x8f0] sm:$0xff]
        %v566 = vld [vmem:[#allocation7 + $0x8f8] sm:$0xff]
        %v567 = vld [vmem:[#allocation7 + $0x900] sm:$0xff]
        %v568 = vld [vmem:[#allocation7 + $0x908] sm:$0xff]
        %v569 = vld [vmem:[#allocation7 + $0x910] sm:$0xff]
        %v570 = vld [vmem:[#allocation7 + $0x918] sm:$0xff]
        %v571 = vld [vmem:[#allocation7 + $0x920] sm:$0xff]
        %v572 = vld [vmem:[#allocation7 + $0x928] sm:$0xff]
        %v573 = vld [vmem:[#allocation7 + $0x930] sm:$0xff]
        %v574 = vld [vmem:[#allocation7 + $0x938] sm:$0xff]
        %v575 = vld [vmem:[#allocation7 + $0x940] sm:$0xff]
        %v576 = vld [vmem:[#allocation7 + $0x948] sm:$0xff]
        %v577 = vld [vmem:[#allocation7 + $0x950] sm:$0xff]
        %v578 = vld [vmem:[#allocation7 + $0x958] sm:$0xff]
        %v579 = vld [vmem:[#allocation7 + $0x960] sm:$0xff]
        %v580 = vld [vmem:[#allocation7 + $0x968] sm:$0xff]
        %v581 = vld [vmem:[#allocation7 + $0x970] sm:$0xff]
        %v582 = vld [vmem:[#allocation7 + $0x978] sm:$0xff]
        %v583 = vld [vmem:[#allocation7 + $0x980] sm:$0xff]
        %v584 = vld [vmem:[#allocation7 + $0x988] sm:$0xff]
        %v585 = vld [vmem:[#allocation7 + $0x990] sm:$0xff]
        %v586 = vld [vmem:[#allocation7 + $0x998] sm:$0xff]
        %v587 = vld [vmem:[#allocation7 + $0x9a0] sm:$0xff]
        %v588 = vld [vmem:[#allocation7 + $0x9a8] sm:$0xff]
        %v589 = vld [vmem:[#allocation7 + $0x9b0] sm:$0xff]
        %v590 = vld [vmem:[#allocation7 + $0x9b8] sm:$0xff]
        %v591 = vld [vmem:[#allocation7 + $0x9c0] sm:$0xff]
        %v592 = vld [vmem:[#allocation7 + $0x9c8] sm:$0xff]
        %v593 = vld [vmem:[#allocation7 + $0x9d0] sm:$0xff]
        %v594 = vld [vmem:[#allocation7 + $0x9d8] sm:$0xff]
        %v595 = vld [vmem:[#allocation7 + $0x9e0] sm:$0xff]
        %v596 = vld [vmem:[#allocation7 + $0x9e8] sm:$0xff]
        %v597 = vld [vmem:[#allocation7 + $0x9f0] sm:$0xff]
        %v598 = vld [vmem:[#allocation7 + $0x9f8] sm:$0xff]
        %v599 = vld [vmem:[#allocation7 + $0xa00] sm:$0xff]
        %v600 = vld [vmem:[#allocation7 + $0xa08] sm:$0xff]
        %v601 = vld [vmem:[#allocation7 + $0xa10] sm:$0xff]
        %v602 = vld [vmem:[#allocation7 + $0xa18] sm:$0xff]
        %v603 = vld [vmem:[#allocation7 + $0xa20] sm:$0xff]
        %v604 = vld [vmem:[#allocation7 + $0xa28] sm:$0xff]
        %v605 = vld [vmem:[#allocation7 + $0xa30] sm:$0xff]
        %v606 = vld [vmem:[#allocation7 + $0xa38] sm:$0xff]
        %v607 = vld [vmem:[#allocation7 + $0xa40] sm:$0xff]
        %v608 = vld [vmem:[#allocation7 + $0xa48] sm:$0xff]
        %v609 = vld [vmem:[#allocation7 + $0xa50] sm:$0xff]
        %v610 = vld [vmem:[#allocation7 + $0xa58] sm:$0xff]
        %v611 = vld [vmem:[#allocation7 + $0xa60] sm:$0xff]
        %v612 = vld [vmem:[#allocation7 + $0xa68] sm:$0xff]
        %v613 = vld [vmem:[#allocation7 + $0xa70] sm:$0xff]
        %v614 = vld [vmem:[#allocation7 + $0xa78] sm:$0xff]
        %v615 = vld [vmem:[#allocation7 + $0xa80] sm:$0xff]
        %v616 = vld [vmem:[#allocation7 + $0xa88] sm:$0xff]
        %v617 = vld [vmem:[#allocation7 + $0xa90] sm:$0xff]
        %v618 = vld [vmem:[#allocation7 + $0xa98] sm:$0xff]
        %v619 = vld [vmem:[#allocation7 + $0xaa0] sm:$0xff]
        %v620 = vld [vmem:[#allocation7 + $0xaa8] sm:$0xff]
        %v621 = vld [vmem:[#allocation7 + $0xab0] sm:$0xff]
        %v622 = vld [vmem:[#allocation7 + $0xab8] sm:$0xff]
        %v623 = vld [vmem:[#allocation7 + $0xac0] sm:$0xff]
        %v624 = vld [vmem:[#allocation7 + $0xac8] sm:$0xff]
        %v625 = vld [vmem:[#allocation7 + $0xad0] sm:$0xff]
        %v626 = vld [vmem:[#allocation7 + $0xad8] sm:$0xff]
        %v627 = vld [vmem:[#allocation7 + $0xae0] sm:$0xff]
        %v628 = vld [vmem:[#allocation7 + $0xae8] sm:$0xff]
        %v629 = vld [vmem:[#allocation7 + $0xaf0] sm:$0xff]
        %v630 = vld [vmem:[#allocation7 + $0xaf8] sm:$0xff]
        %v631 = vld [vmem:[#allocation7 + $0xb00] sm:$0xff]
        %v632 = vld [vmem:[#allocation7 + $0xb08] sm:$0xff]
        %v633 = vld [vmem:[#allocation7 + $0xb10] sm:$0xff]
        %v634 = vld [vmem:[#allocation7 + $0xb18] sm:$0xff]
        %v635 = vld [vmem:[#allocation7 + $0xb20] sm:$0xff]
        %v636 = vld [vmem:[#allocation7 + $0xb28] sm:$0xff]
        %v637 = vld [vmem:[#allocation7 + $0xb30] sm:$0xff]
        %v638 = vld [vmem:[#allocation7 + $0xb38] sm:$0xff]
        %v639 = vld [vmem:[#allocation7 + $0xb40] sm:$0xff]
        %v640 = vld [vmem:[#allocation7 + $0xb48] sm:$0xff]
        %v641 = vld [vmem:[#allocation7 + $0xb50] sm:$0xff]
        %v642 = vld [vmem:[#allocation7 + $0xb58] sm:$0xff]
        %v643 = vld [vmem:[#allocation7 + $0xb60] sm:$0xff]
        %v644 = vld [vmem:[#allocation7 + $0xb68] sm:$0xff]
        %v645 = vld [vmem:[#allocation7 + $0xb70] sm:$0xff]
        %v646 = vld [vmem:[#allocation7 + $0xb78] sm:$0xff]
        %v647 = vld [vmem:[#allocation7 + $0xb80] sm:$0xff]
        %v648 = vld [vmem:[#allocation7 + $0xb88] sm:$0xff]
        %v649 = vld [vmem:[#allocation7 + $0xb90] sm:$0xff]
        %v650 = vld [vmem:[#allocation7 + $0xb98] sm:$0xff]
        %v651 = vld [vmem:[#allocation7 + $0xba0] sm:$0xff]
        %v652 = vld [vmem:[#allocation7 + $0xba8] sm:$0xff]
        %v653 = vld [vmem:[#allocation7 + $0xbb0] sm:$0xff]
        %v654 = vld [vmem:[#allocation7 + $0xbb8] sm:$0xff]
        %v655 = vld [vmem:[#allocation7 + $0xbc0] sm:$0xff]
        %v656 = vld [vmem:[#allocation7 + $0xbc8] sm:$0xff]
        %v657 = vld [vmem:[#allocation7 + $0xbd0] sm:$0xff]
        %v658 = vld [vmem:[#allocation7 + $0xbd8] sm:$0xff]
        %v659 = vld [vmem:[#allocation7 + $0xbe0] sm:$0xff]
        %v660 = vld [vmem:[#allocation7 + $0xbe8] sm:$0xff]
        %v661 = vld [vmem:[#allocation7 + $0xbf0] sm:$0xff]
        %v662 = vld [vmem:[#allocation7 + $0xbf8] sm:$0xff]
        %v663 = vld [vmem:[#allocation7 + $0xc00] sm:$0xff]
        %v664 = vld [vmem:[#allocation7 + $0xc08] sm:$0xff]
        %v665 = vld [vmem:[#allocation7 + $0xc10] sm:$0xff]
        %v666 = vld [vmem:[#allocation7 + $0xc18] sm:$0xff]
        %v667 = vld [vmem:[#allocation7 + $0xc20] sm:$0xff]
        %v668 = vld [vmem:[#allocation7 + $0xc28] sm:$0xff]
        %v669 = vld [vmem:[#allocation7 + $0xc30] sm:$0xff]
        %v670 = vld [vmem:[#allocation7 + $0xc38] sm:$0xff]
        %v671 = vld [vmem:[#allocation7 + $0xc40] sm:$0xff]
        %v672 = vld [vmem:[#allocation7 + $0xc48] sm:$0xff]
        %v673 = vld [vmem:[#allocation7 + $0xc50] sm:$0xff]
        %v674 = vld [vmem:[#allocation7 + $0xc58] sm:$0xff]
        %v675 = vld [vmem:[#allocation7 + $0xc60] sm:$0xff]
        %v676 = vld [vmem:[#allocation7 + $0xc68] sm:$0xff]
        %v677 = vld [vmem:[#allocation7 + $0xc70] sm:$0xff]
        %v678 = vld [vmem:[#allocation7 + $0xc78] sm:$0xff]
        %v679 = vld [vmem:[#allocation7 + $0xc80] sm:$0xff]
        %v680 = vld [vmem:[#allocation7 + $0xc88] sm:$0xff]
        %v681 = vld [vmem:[#allocation7 + $0xc90] sm:$0xff]
        %v682 = vld [vmem:[#allocation7 + $0xc98] sm:$0xff]
        %v683 = vld [vmem:[#allocation7 + $0xca0] sm:$0xff]
        %v684 = vld [vmem:[#allocation7 + $0xca8] sm:$0xff]
        %v685 = vld [vmem:[#allocation7 + $0xcb0] sm:$0xff]
        %v686 = vld [vmem:[#allocation7 + $0xcb8] sm:$0xff]
        %v687 = vld [vmem:[#allocation7 + $0xcc0] sm:$0xff]
        %v688 = vld [vmem:[#allocation7 + $0xcc8] sm:$0xff]
        %v689 = vld [vmem:[#allocation7 + $0xcd0] sm:$0xff]
        %v690 = vld [vmem:[#allocation7 + $0xcd8] sm:$0xff]
        %v691 = vld [vmem:[#allocation7 + $0xce0] sm:$0xff]
        %v692 = vld [vmem:[#allocation7 + $0xce8] sm:$0xff]
        %v693 = vld [vmem:[#allocation7 + $0xcf0] sm:$0xff]
        %v694 = vld [vmem:[#allocation7 + $0xcf8] sm:$0xff]
        %v695 = vld [vmem:[#allocation7 + $0xd00] sm:$0xff]
        %v696 = vld [vmem:[#allocation7 + $0xd08] sm:$0xff]
        %v697 = vld [vmem:[#allocation7 + $0xd10] sm:$0xff]
        %v698 = vld [vmem:[#allocation7 + $0xd18] sm:$0xff]
        %v699 = vld [vmem:[#allocation7 + $0xd20] sm:$0xff]
        %v700 = vld [vmem:[#allocation7 + $0xd28] sm:$0xff]
        %v701 = vld [vmem:[#allocation7 + $0xd30] sm:$0xff]
        %v702 = vld [vmem:[#allocation7 + $0xd38] sm:$0xff]
        %v703 = vld [vmem:[#allocation7 + $0xd40] sm:$0xff]
        %v704 = vld [vmem:[#allocation7 + $0xd48] sm:$0xff]
        %v705 = vld [vmem:[#allocation7 + $0xd50] sm:$0xff]
        %v706 = vld [vmem:[#allocation7 + $0xd58] sm:$0xff]
        %v707 = vld [vmem:[#allocation7 + $0xd60] sm:$0xff]
        %v708 = vld [vmem:[#allocation7 + $0xd68] sm:$0xff]
        %v709 = vld [vmem:[#allocation7 + $0xd70] sm:$0xff]
        %v710 = vld [vmem:[#allocation7 + $0xd78] sm:$0xff]
        %v711 = vld [vmem:[#allocation7 + $0xd80] sm:$0xff]
        %v712 = vld [vmem:[#allocation7 + $0xd88] sm:$0xff]
        %v713 = vld [vmem:[#allocation7 + $0xd90] sm:$0xff]
        %v714 = vld [vmem:[#allocation7 + $0xd98] sm:$0xff]
        %v715 = vld [vmem:[#allocation7 + $0xda0] sm:$0xff]
        %v716 = vld [vmem:[#allocation7 + $0xda8] sm:$0xff]
        %v717 = vld [vmem:[#allocation7 + $0xdb0] sm:$0xff]
        %v718 = vld [vmem:[#allocation7 + $0xdb8] sm:$0xff]
        %v719 = vld [vmem:[#allocation7 + $0xdc0] sm:$0xff]
        %v720 = vld [vmem:[#allocation7 + $0xdc8] sm:$0xff]
        %v721 = vld [vmem:[#allocation7 + $0xdd0] sm:$0xff]
        %v722 = vld [vmem:[#allocation7 + $0xdd8] sm:$0xff]
        %v723 = vld [vmem:[#allocation7 + $0xde0] sm:$0xff]
        %v724 = vld [vmem:[#allocation7 + $0xde8] sm:$0xff]
        %v725 = vld [vmem:[#allocation7 + $0xdf0] sm:$0xff]
        %v726 = vld [vmem:[#allocation7 + $0xdf8] sm:$0xff]
        %v727 = vld [vmem:[#allocation7 + $0xe00] sm:$0xff]
        %v728 = vld [vmem:[#allocation7 + $0xe08] sm:$0xff]
        %v729 = vld [vmem:[#allocation7 + $0xe10] sm:$0xff]
        %v730 = vld [vmem:[#allocation7 + $0xe18] sm:$0xff]
        %v731 = vld [vmem:[#allocation7 + $0xe20] sm:$0xff]
        %v732 = vld [vmem:[#allocation7 + $0xe28] sm:$0xff]
        %v733 = vld [vmem:[#allocation7 + $0xe30] sm:$0xff]
        %v734 = vld [vmem:[#allocation7 + $0xe38] sm:$0xff]
        %v735 = vld [vmem:[#allocation7 + $0xe40] sm:$0xff]
        %v736 = vld [vmem:[#allocation7 + $0xe48] sm:$0xff]
        %v737 = vld [vmem:[#allocation7 + $0xe50] sm:$0xff]
        %v738 = vld [vmem:[#allocation7 + $0xe58] sm:$0xff]
        %v739 = vld [vmem:[#allocation7 + $0xe60] sm:$0xff]
        %v740 = vld [vmem:[#allocation7 + $0xe68] sm:$0xff]
        %v741 = vld [vmem:[#allocation7 + $0xe70] sm:$0xff]
        %v742 = vld [vmem:[#allocation7 + $0xe78] sm:$0xff]
        %v743 = vld [vmem:[#allocation7 + $0xe80] sm:$0xff]
        %v744 = vld [vmem:[#allocation7 + $0xe88] sm:$0xff]
        %v745 = vld [vmem:[#allocation7 + $0xe90] sm:$0xff]
        %v746 = vld [vmem:[#allocation7 + $0xe98] sm:$0xff]
        %v747 = vld [vmem:[#allocation7 + $0xea0] sm:$0xff]
        %v748 = vld [vmem:[#allocation7 + $0xea8] sm:$0xff]
        %v749 = vld [vmem:[#allocation7 + $0xeb0] sm:$0xff]
        %v750 = vld [vmem:[#allocation7 + $0xeb8] sm:$0xff]
        %v751 = vld [vmem:[#allocation7 + $0xec0] sm:$0xff]
        %v752 = vld [vmem:[#allocation7 + $0xec8] sm:$0xff]
        %v753 = vld [vmem:[#allocation7 + $0xed0] sm:$0xff]
        %v754 = vld [vmem:[#allocation7 + $0xed8] sm:$0xff]
        %v755 = vld [vmem:[#allocation7 + $0xee0] sm:$0xff]
        %v756 = vld [vmem:[#allocation7 + $0xee8] sm:$0xff]
        %v757 = vld [vmem:[#allocation7 + $0xef0] sm:$0xff]
        %v758 = vld [vmem:[#allocation7 + $0xef8] sm:$0xff]
        %v759 = vld [vmem:[#allocation7 + $0xf00] sm:$0xff]
        %v760 = vld [vmem:[#allocation7 + $0xf08] sm:$0xff]
        %v761 = vld [vmem:[#allocation7 + $0xf10] sm:$0xff]
        %v762 = vld [vmem:[#allocation7 + $0xf18] sm:$0xff]
        %v763 = vld [vmem:[#allocation7 + $0xf20] sm:$0xff]
        %v764 = vld [vmem:[#allocation7 + $0xf28] sm:$0xff]
        %v765 = vld [vmem:[#allocation7 + $0xf30] sm:$0xff]
        %v766 = vld [vmem:[#allocation7 + $0xf38] sm:$0xff]
        %v767 = vld [vmem:[#allocation7 + $0xf40] sm:$0xff]
        %v768 = vld [vmem:[#allocation7 + $0xf48] sm:$0xff]
        %v769 = vld [vmem:[#allocation7 + $0xf50] sm:$0xff]
        %v770 = vld [vmem:[#allocation7 + $0xf58] sm:$0xff]
        %v771 = vld [vmem:[#allocation7 + $0xf60] sm:$0xff]
        %v772 = vld [vmem:[#allocation7 + $0xf68] sm:$0xff]
        %v773 = vld [vmem:[#allocation7 + $0xf70] sm:$0xff]
        %v774 = vld [vmem:[#allocation7 + $0xf78] sm:$0xff]
        %v775 = vld [vmem:[#allocation7 + $0xf80] sm:$0xff]
        %v776 = vld [vmem:[#allocation7 + $0xf88] sm:$0xff]
        %v777 = vld [vmem:[#allocation7 + $0xf90] sm:$0xff]
        %v778 = vld [vmem:[#allocation7 + $0xf98] sm:$0xff]
        %v779 = vld [vmem:[#allocation7 + $0xfa0] sm:$0xff]
        %v780 = vld [vmem:[#allocation7 + $0xfa8] sm:$0xff]
        %v781 = vld [vmem:[#allocation7 + $0xfb0] sm:$0xff]
        %v782 = vld [vmem:[#allocation7 + $0xfb8] sm:$0xff]
        %v783 = vld [vmem:[#allocation7 + $0xfc0] sm:$0xff]
        %v784 = vld [vmem:[#allocation7 + $0xfc8] sm:$0xff]
        %v785 = vld [vmem:[#allocation7 + $0xfd0] sm:$0xff]
        %v786 = vld [vmem:[#allocation7 + $0xfd8] sm:$0xff]
        %v787 = vld [vmem:[#allocation7 + $0xfe0] sm:$0xff]
        %v788 = vld [vmem:[#allocation7 + $0xfe8] sm:$0xff]
        %v789 = vld [vmem:[#allocation7 + $0xff0] sm:$0xff]
        %v790 = vld [vmem:[#allocation7 + $0xff8] sm:$0xff]
        %v791 = vld [vmem:[#allocation9] sm:$0xff]
        %v793 = vperm.slane %v791, 0
        %v794 = vperm.slane %v791, 1
        %v795 = vperm.slane %v791, 2
        %v796 = vperm.slane %v791, 3
        %v797 = vperm.slane %v791, 4
        %v798 = vperm.slane %v791, 5
        %v799 = vperm.slane %v791, 6
        %v800 = vperm.slane %v791, 7
        %809 = vmatpush.msra.mxu0 %v399
        %810 = vmatpush.msra.mxu0 %v391
        %811 = vmatpush.msra.mxu0 %v383
        %812 = vmatpush.msra.mxu0 %v375
        %813 = vmatpush.msra.mxu0 %v367
        %814 = vmatpush.msra.mxu0 %v359
        %815 = vmatpush.msra.mxu0 %v351
        %816 = vmatpush.msra.mxu0 %v343
        %817 = vmatpush.msra.mxu0 %v335
        %818 = vmatpush.msra.mxu0 %v327
        %819 = vmatpush.msra.mxu0 %v319
        %820 = vmatpush.msra.mxu0 %v311
        %821 = vmatpush.msra.mxu0 %v303
        %822 = vmatpush.msra.mxu0 %v295
        %823 = vmatpush.msra.mxu0 %v287
        %824 = vmatpush.msra.mxu0 %v279
        %825 = vmatmul.f32.gmra.mxu0 %v270
        %v826 = vpop.f32.mrf.mxu0
        %v827 = vadd.f32 %v793, %v826
        %828 = vdwg.mxu0
        %829 = vmatpush.msra.mxu0 %v527
        %830 = vmatpush.msra.mxu0 %v519
        %831 = vmatpush.msra.mxu0 %v511
        %832 = vmatpush.msra.mxu0 %v503
        %833 = vmatpush.msra.mxu0 %v495
        %834 = vmatpush.msra.mxu0 %v487
        %835 = vmatpush.msra.mxu0 %v479
        %836 = vmatpush.msra.mxu0 %v471
        %837 = vmatpush.msra.mxu0 %v463
        %838 = vmatpush.msra.mxu0 %v455
        %839 = vmatpush.msra.mxu0 %v447
        %840 = vmatpush.msra.mxu0 %v439
        %841 = vmatpush.msra.mxu0 %v431
        %842 = vmatpush.msra.mxu0 %v423
        %843 = vmatpush.msra.mxu0 %v415
        %844 = vmatpush.msra.mxu0 %v407
        %845 = vmatmul.f32.gmra.mxu0 %v271
        %v846 = vpop.f32.mrf.mxu0
        %v847 = vadd.f32 %v827, %v846
        %848 = vdwg.mxu0
        %849 = vmatpush.msra.mxu0 %v655
        %850 = vmatpush.msra.mxu0 %v647
        %851 = vmatpush.msra.mxu0 %v639
        %852 = vmatpush.msra.mxu0 %v631
        %853 = vmatpush.msra.mxu0 %v623
        %854 = vmatpush.msra.mxu0 %v615
        %855 = vmatpush.msra.mxu0 %v607
        %856 = vmatpush.msra.mxu0 %v599
        %857 = vmatpush.msra.mxu0 %v591
        %858 = vmatpush.msra.mxu0 %v583
        %859 = vmatpush.msra.mxu0 %v575
        %860 = vmatpush.msra.mxu0 %v567
        %861 = vmatpush.msra.mxu0 %v559
        %862 = vmatpush.msra.mxu0 %v551
        %863 = vmatpush.msra.mxu0 %v543
        %864 = vmatpush.msra.mxu0 %v535
        %865 = vmatmul.f32.gmra.mxu0 %v275
        %v866 = vpop.f32.mrf.mxu0
        %v867 = vadd.f32 %v847, %v866
        %868 = vdwg.mxu0
        %869 = vmatpush.msra.mxu0 %v783
        %870 = vmatpush.msra.mxu0 %v775
        %871 = vmatpush.msra.mxu0 %v767
        %872 = vmatpush.msra.mxu0 %v759
        %873 = vmatpush.msra.mxu0 %v751
        %874 = vmatpush.msra.mxu0 %v743
        %875 = vmatpush.msra.mxu0 %v735
        %876 = vmatpush.msra.mxu0 %v727
        %877 = vmatpush.msra.mxu0 %v719
        %878 = vmatpush.msra.mxu0 %v711
        %879 = vmatpush.msra.mxu0 %v703
        %880 = vmatpush.msra.mxu0 %v695
        %881 = vmatpush.msra.mxu0 %v687
        %882 = vmatpush.msra.mxu0 %v679
        %883 = vmatpush.msra.mxu0 %v671
        %884 = vmatpush.msra.mxu0 %v663
        %885 = vmatmul.f32.gmra.mxu0 %v276
        %v886 = vpop.f32.mrf.mxu0
        %v887 = vadd.f32 %v867, %v886
        %888 = vdwg.mxu0
        %889 = vmatpush.msra.mxu0 %v400
        %890 = vmatpush.msra.mxu0 %v392
        %891 = vmatpush.msra.mxu0 %v384
        %892 = vmatpush.msra.mxu0 %v376
        %893 = vmatpush.msra.mxu0 %v368
        %894 = vmatpush.msra.mxu0 %v360
        %895 = vmatpush.msra.mxu0 %v352
        %896 = vmatpush.msra.mxu0 %v344
        %897 = vmatpush.msra.mxu0 %v336
        %898 = vmatpush.msra.mxu0 %v328
        %899 = vmatpush.msra.mxu0 %v320
        %900 = vmatpush.msra.mxu0 %v312
        %901 = vmatpush.msra.mxu0 %v304
        %902 = vmatpush.msra.mxu0 %v296
        %903 = vmatpush.msra.mxu0 %v288
        %904 = vmatpush.msra.mxu0 %v280
        %905 = vmatmul.f32.gmra.mxu0 %v270
        %v906 = vpop.f32.mrf.mxu0
        %v907 = vadd.f32 %v794, %v906
        %908 = vdwg.mxu0
        %909 = vmatpush.msra.mxu0 %v528
        %910 = vmatpush.msra.mxu0 %v520
        %911 = vmatpush.msra.mxu0 %v512
        %912 = vmatpush.msra.mxu0 %v504
        %913 = vmatpush.msra.mxu0 %v496
        %914 = vmatpush.msra.mxu0 %v488
        %915 = vmatpush.msra.mxu0 %v480
        %916 = vmatpush.msra.mxu0 %v472
        %917 = vmatpush.msra.mxu0 %v464
        %918 = vmatpush.msra.mxu0 %v456
        %919 = vmatpush.msra.mxu0 %v448
        %920 = vmatpush.msra.mxu0 %v440
        %921 = vmatpush.msra.mxu0 %v432
        %922 = vmatpush.msra.mxu0 %v424
        %923 = vmatpush.msra.mxu0 %v416
        %924 = vmatpush.msra.mxu0 %v408
        %925 = vmatmul.f32.gmra.mxu0 %v271
        %v926 = vpop.f32.mrf.mxu0
        %v927 = vadd.f32 %v907, %v926
        %928 = vdwg.mxu0
        %929 = vmatpush.msra.mxu0 %v656
        %930 = vmatpush.msra.mxu0 %v648
        %931 = vmatpush.msra.mxu0 %v640
        %932 = vmatpush.msra.mxu0 %v632
        %933 = vmatpush.msra.mxu0 %v624
        %934 = vmatpush.msra.mxu0 %v616
        %935 = vmatpush.msra.mxu0 %v608
        %936 = vmatpush.msra.mxu0 %v600
        %937 = vmatpush.msra.mxu0 %v592
        %938 = vmatpush.msra.mxu0 %v584
        %939 = vmatpush.msra.mxu0 %v576
        %940 = vmatpush.msra.mxu0 %v568
        %941 = vmatpush.msra.mxu0 %v560
        %942 = vmatpush.msra.mxu0 %v552
        %943 = vmatpush.msra.mxu0 %v544
        %944 = vmatpush.msra.mxu0 %v536
        %945 = vmatmul.f32.gmra.mxu0 %v275
        %v946 = vpop.f32.mrf.mxu0
        %v947 = vadd.f32 %v927, %v946
        %948 = vdwg.mxu0
        %949 = vmatpush.msra.mxu0 %v784
        %950 = vmatpush.msra.mxu0 %v776
        %951 = vmatpush.msra.mxu0 %v768
        %952 = vmatpush.msra.mxu0 %v760
        %953 = vmatpush.msra.mxu0 %v752
        %954 = vmatpush.msra.mxu0 %v744
        %955 = vmatpush.msra.mxu0 %v736
        %956 = vmatpush.msra.mxu0 %v728
        %957 = vmatpush.msra.mxu0 %v720
        %958 = vmatpush.msra.mxu0 %v712
        %959 = vmatpush.msra.mxu0 %v704
        %960 = vmatpush.msra.mxu0 %v696
        %961 = vmatpush.msra.mxu0 %v688
        %962 = vmatpush.msra.mxu0 %v680
        %963 = vmatpush.msra.mxu0 %v672
        %964 = vmatpush.msra.mxu0 %v664
        %965 = vmatmul.f32.gmra.mxu0 %v276
        %v966 = vpop.f32.mrf.mxu0
        %v967 = vadd.f32 %v947, %v966
        %968 = vdwg.mxu0
        %969 = vmatpush.msra.mxu0 %v401
        %970 = vmatpush.msra.mxu0 %v393
        %971 = vmatpush.msra.mxu0 %v385
        %972 = vmatpush.msra.mxu0 %v377
        %973 = vmatpush.msra.mxu0 %v369
        %974 = vmatpush.msra.mxu0 %v361
        %975 = vmatpush.msra.mxu0 %v353
        %976 = vmatpush.msra.mxu0 %v345
        %977 = vmatpush.msra.mxu0 %v337
        %978 = vmatpush.msra.mxu0 %v329
        %979 = vmatpush.msra.mxu0 %v321
        %980 = vmatpush.msra.mxu0 %v313
        %981 = vmatpush.msra.mxu0 %v305
        %982 = vmatpush.msra.mxu0 %v297
        %983 = vmatpush.msra.mxu0 %v289
        %984 = vmatpush.msra.mxu0 %v281
        %985 = vmatmul.f32.gmra.mxu0 %v270
        %v986 = vpop.f32.mrf.mxu0
        %v987 = vadd.f32 %v795, %v986
        %988 = vdwg.mxu0
        %989 = vmatpush.msra.mxu0 %v529
        %990 = vmatpush.msra.mxu0 %v521
        %991 = vmatpush.msra.mxu0 %v513
        %992 = vmatpush.msra.mxu0 %v505
        %993 = vmatpush.msra.mxu0 %v497
        %994 = vmatpush.msra.mxu0 %v489
        %995 = vmatpush.msra.mxu0 %v481
        %996 = vmatpush.msra.mxu0 %v473
        %997 = vmatpush.msra.mxu0 %v465
        %998 = vmatpush.msra.mxu0 %v457
        %999 = vmatpush.msra.mxu0 %v449
        %1000 = vmatpush.msra.mxu0 %v441
        %1001 = vmatpush.msra.mxu0 %v433
        %1002 = vmatpush.msra.mxu0 %v425
        %1003 = vmatpush.msra.mxu0 %v417
        %1004 = vmatpush.msra.mxu0 %v409
        %1005 = vmatmul.f32.gmra.mxu0 %v271
        %v1006 = vpop.f32.mrf.mxu0
        %v1007 = vadd.f32 %v987, %v1006
        %1008 = vdwg.mxu0
        %1009 = vmatpush.msra.mxu0 %v657
        %1010 = vmatpush.msra.mxu0 %v649
        %1011 = vmatpush.msra.mxu0 %v641
        %1012 = vmatpush.msra.mxu0 %v633
        %1013 = vmatpush.msra.mxu0 %v625
        %1014 = vmatpush.msra.mxu0 %v617
        %1015 = vmatpush.msra.mxu0 %v609
        %1016 = vmatpush.msra.mxu0 %v601
        %1017 = vmatpush.msra.mxu0 %v593
        %1018 = vmatpush.msra.mxu0 %v585
        %1019 = vmatpush.msra.mxu0 %v577
        %1020 = vmatpush.msra.mxu0 %v569
        %1021 = vmatpush.msra.mxu0 %v561
        %1022 = vmatpush.msra.mxu0 %v553
        %1023 = vmatpush.msra.mxu0 %v545
        %1024 = vmatpush.msra.mxu0 %v537
        %1025 = vmatmul.f32.gmra.mxu0 %v275
        %v1026 = vpop.f32.mrf.mxu0
        %v1027 = vadd.f32 %v1007, %v1026
        %1028 = vdwg.mxu0
        %1029 = vmatpush.msra.mxu0 %v785
        %1030 = vmatpush.msra.mxu0 %v777
        %1031 = vmatpush.msra.mxu0 %v769
        %1032 = vmatpush.msra.mxu0 %v761
        %1033 = vmatpush.msra.mxu0 %v753
        %1034 = vmatpush.msra.mxu0 %v745
        %1035 = vmatpush.msra.mxu0 %v737
        %1036 = vmatpush.msra.mxu0 %v729
        %1037 = vmatpush.msra.mxu0 %v721
        %1038 = vmatpush.msra.mxu0 %v713
        %1039 = vmatpush.msra.mxu0 %v705
        %1040 = vmatpush.msra.mxu0 %v697
        %1041 = vmatpush.msra.mxu0 %v689
        %1042 = vmatpush.msra.mxu0 %v681
        %1043 = vmatpush.msra.mxu0 %v673
        %1044 = vmatpush.msra.mxu0 %v665
        %1045 = vmatmul.f32.gmra.mxu0 %v276
        %v1046 = vpop.f32.mrf.mxu0
        %v1047 = vadd.f32 %v1027, %v1046
        %1048 = vdwg.mxu0
        %1049 = vmatpush.msra.mxu0 %v402
        %1050 = vmatpush.msra.mxu0 %v394
        %1051 = vmatpush.msra.mxu0 %v386
        %1052 = vmatpush.msra.mxu0 %v378
        %1053 = vmatpush.msra.mxu0 %v370
        %1054 = vmatpush.msra.mxu0 %v362
        %1055 = vmatpush.msra.mxu0 %v354
        %1056 = vmatpush.msra.mxu0 %v346
        %1057 = vmatpush.msra.mxu0 %v338
        %1058 = vmatpush.msra.mxu0 %v330
        %1059 = vmatpush.msra.mxu0 %v322
        %1060 = vmatpush.msra.mxu0 %v314
        %1061 = vmatpush.msra.mxu0 %v306
        %1062 = vmatpush.msra.mxu0 %v298
        %1063 = vmatpush.msra.mxu0 %v290
        %1064 = vmatpush.msra.mxu0 %v282
        %1065 = vmatmul.f32.gmra.mxu0 %v270
        %v1066 = vpop.f32.mrf.mxu0
        %v1067 = vadd.f32 %v796, %v1066
        %1068 = vdwg.mxu0
        %1069 = vmatpush.msra.mxu0 %v530
        %1070 = vmatpush.msra.mxu0 %v522
        %1071 = vmatpush.msra.mxu0 %v514
        %1072 = vmatpush.msra.mxu0 %v506
        %1073 = vmatpush.msra.mxu0 %v498
        %1074 = vmatpush.msra.mxu0 %v490
        %1075 = vmatpush.msra.mxu0 %v482
        %1076 = vmatpush.msra.mxu0 %v474
        %1077 = vmatpush.msra.mxu0 %v466
        %1078 = vmatpush.msra.mxu0 %v458
        %1079 = vmatpush.msra.mxu0 %v450
        %1080 = vmatpush.msra.mxu0 %v442
        %1081 = vmatpush.msra.mxu0 %v434
        %1082 = vmatpush.msra.mxu0 %v426
        %1083 = vmatpush.msra.mxu0 %v418
        %1084 = vmatpush.msra.mxu0 %v410
        %1085 = vmatmul.f32.gmra.mxu0 %v271
        %v1086 = vpop.f32.mrf.mxu0
        %v1087 = vadd.f32 %v1067, %v1086
        %1088 = vdwg.mxu0
        %1089 = vmatpush.msra.mxu0 %v658
        %1090 = vmatpush.msra.mxu0 %v650
        %1091 = vmatpush.msra.mxu0 %v642
        %1092 = vmatpush.msra.mxu0 %v634
        %1093 = vmatpush.msra.mxu0 %v626
        %1094 = vmatpush.msra.mxu0 %v618
        %1095 = vmatpush.msra.mxu0 %v610
        %1096 = vmatpush.msra.mxu0 %v602
        %1097 = vmatpush.msra.mxu0 %v594
        %1098 = vmatpush.msra.mxu0 %v586
        %1099 = vmatpush.msra.mxu0 %v578
        %1100 = vmatpush.msra.mxu0 %v570
        %1101 = vmatpush.msra.mxu0 %v562
        %1102 = vmatpush.msra.mxu0 %v554
        %1103 = vmatpush.msra.mxu0 %v546
        %1104 = vmatpush.msra.mxu0 %v538
        %1105 = vmatmul.f32.gmra.mxu0 %v275
        %v1106 = vpop.f32.mrf.mxu0
        %v1107 = vadd.f32 %v1087, %v1106
        %1108 = vdwg.mxu0
        %1109 = vmatpush.msra.mxu0 %v786
        %1110 = vmatpush.msra.mxu0 %v778
        %1111 = vmatpush.msra.mxu0 %v770
        %1112 = vmatpush.msra.mxu0 %v762
        %1113 = vmatpush.msra.mxu0 %v754
        %1114 = vmatpush.msra.mxu0 %v746
        %1115 = vmatpush.msra.mxu0 %v738
        %1116 = vmatpush.msra.mxu0 %v730
        %1117 = vmatpush.msra.mxu0 %v722
        %1118 = vmatpush.msra.mxu0 %v714
        %1119 = vmatpush.msra.mxu0 %v706
        %1120 = vmatpush.msra.mxu0 %v698
        %1121 = vmatpush.msra.mxu0 %v690
        %1122 = vmatpush.msra.mxu0 %v682
        %1123 = vmatpush.msra.mxu0 %v674
        %1124 = vmatpush.msra.mxu0 %v666
        %1125 = vmatmul.f32.gmra.mxu0 %v276
        %v1126 = vpop.f32.mrf.mxu0
        %v1127 = vadd.f32 %v1107, %v1126
        %1128 = vdwg.mxu0
        %1129 = vmatpush.msra.mxu0 %v403
        %1130 = vmatpush.msra.mxu0 %v395
        %1131 = vmatpush.msra.mxu0 %v387
        %1132 = vmatpush.msra.mxu0 %v379
        %1133 = vmatpush.msra.mxu0 %v371
        %1134 = vmatpush.msra.mxu0 %v363
        %1135 = vmatpush.msra.mxu0 %v355
        %1136 = vmatpush.msra.mxu0 %v347
        %1137 = vmatpush.msra.mxu0 %v339
        %1138 = vmatpush.msra.mxu0 %v331
        %1139 = vmatpush.msra.mxu0 %v323
        %1140 = vmatpush.msra.mxu0 %v315
        %1141 = vmatpush.msra.mxu0 %v307
        %1142 = vmatpush.msra.mxu0 %v299
        %1143 = vmatpush.msra.mxu0 %v291
        %1144 = vmatpush.msra.mxu0 %v283
        %1145 = vmatmul.f32.gmra.mxu0 %v270
        %v1146 = vpop.f32.mrf.mxu0
        %v1147 = vadd.f32 %v797, %v1146
        %1148 = vdwg.mxu0
        %1149 = vmatpush.msra.mxu0 %v531
        %1150 = vmatpush.msra.mxu0 %v523
        %1151 = vmatpush.msra.mxu0 %v515
        %1152 = vmatpush.msra.mxu0 %v507
        %1153 = vmatpush.msra.mxu0 %v499
        %1154 = vmatpush.msra.mxu0 %v491
        %1155 = vmatpush.msra.mxu0 %v483
        %1156 = vmatpush.msra.mxu0 %v475
        %1157 = vmatpush.msra.mxu0 %v467
        %1158 = vmatpush.msra.mxu0 %v459
        %1159 = vmatpush.msra.mxu0 %v451
        %1160 = vmatpush.msra.mxu0 %v443
        %1161 = vmatpush.msra.mxu0 %v435
        %1162 = vmatpush.msra.mxu0 %v427
        %1163 = vmatpush.msra.mxu0 %v419
        %1164 = vmatpush.msra.mxu0 %v411
        %1165 = vmatmul.f32.gmra.mxu0 %v271
        %v1166 = vpop.f32.mrf.mxu0
        %v1167 = vadd.f32 %v1147, %v1166
        %1168 = vdwg.mxu0
        %1169 = vmatpush.msra.mxu0 %v659
        %1170 = vmatpush.msra.mxu0 %v651
        %1171 = vmatpush.msra.mxu0 %v643
        %1172 = vmatpush.msra.mxu0 %v635
        %1173 = vmatpush.msra.mxu0 %v627
        %1174 = vmatpush.msra.mxu0 %v619
        %1175 = vmatpush.msra.mxu0 %v611
        %1176 = vmatpush.msra.mxu0 %v603
        %1177 = vmatpush.msra.mxu0 %v595
        %1178 = vmatpush.msra.mxu0 %v587
        %1179 = vmatpush.msra.mxu0 %v579
        %1180 = vmatpush.msra.mxu0 %v571
        %1181 = vmatpush.msra.mxu0 %v563
        %1182 = vmatpush.msra.mxu0 %v555
        %1183 = vmatpush.msra.mxu0 %v547
        %1184 = vmatpush.msra.mxu0 %v539
        %1185 = vmatmul.f32.gmra.mxu0 %v275
        %v1186 = vpop.f32.mrf.mxu0
        %v1187 = vadd.f32 %v1167, %v1186
        %1188 = vdwg.mxu0
        %1189 = vmatpush.msra.mxu0 %v787
        %1190 = vmatpush.msra.mxu0 %v779
        %1191 = vmatpush.msra.mxu0 %v771
        %1192 = vmatpush.msra.mxu0 %v763
        %1193 = vmatpush.msra.mxu0 %v755
        %1194 = vmatpush.msra.mxu0 %v747
        %1195 = vmatpush.msra.mxu0 %v739
        %1196 = vmatpush.msra.mxu0 %v731
        %1197 = vmatpush.msra.mxu0 %v723
        %1198 = vmatpush.msra.mxu0 %v715
        %1199 = vmatpush.msra.mxu0 %v707
        %1200 = vmatpush.msra.mxu0 %v699
        %1201 = vmatpush.msra.mxu0 %v691
        %1202 = vmatpush.msra.mxu0 %v683
        %1203 = vmatpush.msra.mxu0 %v675
        %1204 = vmatpush.msra.mxu0 %v667
        %1205 = vmatmul.f32.gmra.mxu0 %v276
        %v1206 = vpop.f32.mrf.mxu0
        %v1207 = vadd.f32 %v1187, %v1206
        %1208 = vdwg.mxu0
        %1209 = vmatpush.msra.mxu0 %v404
        %1210 = vmatpush.msra.mxu0 %v396
        %1211 = vmatpush.msra.mxu0 %v388
        %1212 = vmatpush.msra.mxu0 %v380
        %1213 = vmatpush.msra.mxu0 %v372
        %1214 = vmatpush.msra.mxu0 %v364
        %1215 = vmatpush.msra.mxu0 %v356
        %1216 = vmatpush.msra.mxu0 %v348
        %1217 = vmatpush.msra.mxu0 %v340
        %1218 = vmatpush.msra.mxu0 %v332
        %1219 = vmatpush.msra.mxu0 %v324
        %1220 = vmatpush.msra.mxu0 %v316
        %1221 = vmatpush.msra.mxu0 %v308
        %1222 = vmatpush.msra.mxu0 %v300
        %1223 = vmatpush.msra.mxu0 %v292
        %1224 = vmatpush.msra.mxu0 %v284
        %1225 = vmatmul.f32.gmra.mxu0 %v270
        %v1226 = vpop.f32.mrf.mxu0
        %v1227 = vadd.f32 %v798, %v1226
        %1228 = vdwg.mxu0
        %1229 = vmatpush.msra.mxu0 %v532
        %1230 = vmatpush.msra.mxu0 %v524
        %1231 = vmatpush.msra.mxu0 %v516
        %1232 = vmatpush.msra.mxu0 %v508
        %1233 = vmatpush.msra.mxu0 %v500
        %1234 = vmatpush.msra.mxu0 %v492
        %1235 = vmatpush.msra.mxu0 %v484
        %1236 = vmatpush.msra.mxu0 %v476
        %1237 = vmatpush.msra.mxu0 %v468
        %1238 = vmatpush.msra.mxu0 %v460
        %1239 = vmatpush.msra.mxu0 %v452
        %1240 = vmatpush.msra.mxu0 %v444
        %1241 = vmatpush.msra.mxu0 %v436
        %1242 = vmatpush.msra.mxu0 %v428
        %1243 = vmatpush.msra.mxu0 %v420
        %1244 = vmatpush.msra.mxu0 %v412
        %1245 = vmatmul.f32.gmra.mxu0 %v271
        %v1246 = vpop.f32.mrf.mxu0
        %v1247 = vadd.f32 %v1227, %v1246
        %1248 = vdwg.mxu0
        %1249 = vmatpush.msra.mxu0 %v660
        %1250 = vmatpush.msra.mxu0 %v652
        %1251 = vmatpush.msra.mxu0 %v644
        %1252 = vmatpush.msra.mxu0 %v636
        %1253 = vmatpush.msra.mxu0 %v628
        %1254 = vmatpush.msra.mxu0 %v620
        %1255 = vmatpush.msra.mxu0 %v612
        %1256 = vmatpush.msra.mxu0 %v604
        %1257 = vmatpush.msra.mxu0 %v596
        %1258 = vmatpush.msra.mxu0 %v588
        %1259 = vmatpush.msra.mxu0 %v580
        %1260 = vmatpush.msra.mxu0 %v572
        %1261 = vmatpush.msra.mxu0 %v564
        %1262 = vmatpush.msra.mxu0 %v556
        %1263 = vmatpush.msra.mxu0 %v548
        %1264 = vmatpush.msra.mxu0 %v540
        %1265 = vmatmul.f32.gmra.mxu0 %v275
        %v1266 = vpop.f32.mrf.mxu0
        %v1267 = vadd.f32 %v1247, %v1266
        %1268 = vdwg.mxu0
        %1269 = vmatpush.msra.mxu0 %v788
        %1270 = vmatpush.msra.mxu0 %v780
        %1271 = vmatpush.msra.mxu0 %v772
        %1272 = vmatpush.msra.mxu0 %v764
        %1273 = vmatpush.msra.mxu0 %v756
        %1274 = vmatpush.msra.mxu0 %v748
        %1275 = vmatpush.msra.mxu0 %v740
        %1276 = vmatpush.msra.mxu0 %v732
        %1277 = vmatpush.msra.mxu0 %v724
        %1278 = vmatpush.msra.mxu0 %v716
        %1279 = vmatpush.msra.mxu0 %v708
        %1280 = vmatpush.msra.mxu0 %v700
        %1281 = vmatpush.msra.mxu0 %v692
        %1282 = vmatpush.msra.mxu0 %v684
        %1283 = vmatpush.msra.mxu0 %v676
        %1284 = vmatpush.msra.mxu0 %v668
        %1285 = vmatmul.f32.gmra.mxu0 %v276
        %v1286 = vpop.f32.mrf.mxu0
        %v1287 = vadd.f32 %v1267, %v1286
        %1288 = vdwg.mxu0
        %1289 = vmatpush.msra.mxu0 %v405
        %1290 = vmatpush.msra.mxu0 %v397
        %1291 = vmatpush.msra.mxu0 %v389
        %1292 = vmatpush.msra.mxu0 %v381
        %1293 = vmatpush.msra.mxu0 %v373
        %1294 = vmatpush.msra.mxu0 %v365
        %1295 = vmatpush.msra.mxu0 %v357
        %1296 = vmatpush.msra.mxu0 %v349
        %1297 = vmatpush.msra.mxu0 %v341
        %1298 = vmatpush.msra.mxu0 %v333
        %1299 = vmatpush.msra.mxu0 %v325
        %1300 = vmatpush.msra.mxu0 %v317
        %1301 = vmatpush.msra.mxu0 %v309
        %1302 = vmatpush.msra.mxu0 %v301
        %1303 = vmatpush.msra.mxu0 %v293
        %1304 = vmatpush.msra.mxu0 %v285
        %1305 = vmatmul.f32.gmra.mxu0 %v270
        %v1306 = vpop.f32.mrf.mxu0
        %v1307 = vadd.f32 %v799, %v1306
        %1308 = vdwg.mxu0
        %1309 = vmatpush.msra.mxu0 %v533
        %1310 = vmatpush.msra.mxu0 %v525
        %1311 = vmatpush.msra.mxu0 %v517
        %1312 = vmatpush.msra.mxu0 %v509
        %1313 = vmatpush.msra.mxu0 %v501
        %1314 = vmatpush.msra.mxu0 %v493
        %1315 = vmatpush.msra.mxu0 %v485
        %1316 = vmatpush.msra.mxu0 %v477
        %1317 = vmatpush.msra.mxu0 %v469
        %1318 = vmatpush.msra.mxu0 %v461
        %1319 = vmatpush.msra.mxu0 %v453
        %1320 = vmatpush.msra.mxu0 %v445
        %1321 = vmatpush.msra.mxu0 %v437
        %1322 = vmatpush.msra.mxu0 %v429
        %1323 = vmatpush.msra.mxu0 %v421
        %1324 = vmatpush.msra.mxu0 %v413
        %1325 = vmatmul.f32.gmra.mxu0 %v271
        %v1326 = vpop.f32.mrf.mxu0
        %v1327 = vadd.f32 %v1307, %v1326
        %1328 = vdwg.mxu0
        %1329 = vmatpush.msra.mxu0 %v661
        %1330 = vmatpush.msra.mxu0 %v653
        %1331 = vmatpush.msra.mxu0 %v645
        %1332 = vmatpush.msra.mxu0 %v637
        %1333 = vmatpush.msra.mxu0 %v629
        %1334 = vmatpush.msra.mxu0 %v621
        %1335 = vmatpush.msra.mxu0 %v613
        %1336 = vmatpush.msra.mxu0 %v605
        %1337 = vmatpush.msra.mxu0 %v597
        %1338 = vmatpush.msra.mxu0 %v589
        %1339 = vmatpush.msra.mxu0 %v581
        %1340 = vmatpush.msra.mxu0 %v573
        %1341 = vmatpush.msra.mxu0 %v565
        %1342 = vmatpush.msra.mxu0 %v557
        %1343 = vmatpush.msra.mxu0 %v549
        %1344 = vmatpush.msra.mxu0 %v541
        %1345 = vmatmul.f32.gmra.mxu0 %v275
        %v1346 = vpop.f32.mrf.mxu0
        %v1347 = vadd.f32 %v1327, %v1346
        %1348 = vdwg.mxu0
        %1349 = vmatpush.msra.mxu0 %v789
        %1350 = vmatpush.msra.mxu0 %v781
        %1351 = vmatpush.msra.mxu0 %v773
        %1352 = vmatpush.msra.mxu0 %v765
        %1353 = vmatpush.msra.mxu0 %v757
        %1354 = vmatpush.msra.mxu0 %v749
        %1355 = vmatpush.msra.mxu0 %v741
        %1356 = vmatpush.msra.mxu0 %v733
        %1357 = vmatpush.msra.mxu0 %v725
        %1358 = vmatpush.msra.mxu0 %v717
        %1359 = vmatpush.msra.mxu0 %v709
        %1360 = vmatpush.msra.mxu0 %v701
        %1361 = vmatpush.msra.mxu0 %v693
        %1362 = vmatpush.msra.mxu0 %v685
        %1363 = vmatpush.msra.mxu0 %v677
        %1364 = vmatpush.msra.mxu0 %v669
        %1365 = vmatmul.f32.gmra.mxu0 %v276
        %v1366 = vpop.f32.mrf.mxu0
        %v1367 = vadd.f32 %v1347, %v1366
        %1368 = vdwg.mxu0
        %1369 = vmatpush.msra.mxu0 %v406
        %1370 = vmatpush.msra.mxu0 %v398
        %1371 = vmatpush.msra.mxu0 %v390
        %1372 = vmatpush.msra.mxu0 %v382
        %1373 = vmatpush.msra.mxu0 %v374
        %1374 = vmatpush.msra.mxu0 %v366
        %1375 = vmatpush.msra.mxu0 %v358
        %1376 = vmatpush.msra.mxu0 %v350
        %1377 = vmatpush.msra.mxu0 %v342
        %1378 = vmatpush.msra.mxu0 %v334
        %1379 = vmatpush.msra.mxu0 %v326
        %1380 = vmatpush.msra.mxu0 %v318
        %1381 = vmatpush.msra.mxu0 %v310
        %1382 = vmatpush.msra.mxu0 %v302
        %1383 = vmatpush.msra.mxu0 %v294
        %1384 = vmatpush.msra.mxu0 %v286
        %1385 = vmatmul.f32.gmra.mxu0 %v270
        %v1386 = vpop.f32.mrf.mxu0
        %v1387 = vadd.f32 %v800, %v1386
        %1388 = vdwg.mxu0
        %1389 = vmatpush.msra.mxu0 %v534
        %1390 = vmatpush.msra.mxu0 %v526
        %1391 = vmatpush.msra.mxu0 %v518
        %1392 = vmatpush.msra.mxu0 %v510
        %1393 = vmatpush.msra.mxu0 %v502
        %1394 = vmatpush.msra.mxu0 %v494
        %1395 = vmatpush.msra.mxu0 %v486
        %1396 = vmatpush.msra.mxu0 %v478
        %1397 = vmatpush.msra.mxu0 %v470
        %1398 = vmatpush.msra.mxu0 %v462
        %1399 = vmatpush.msra.mxu0 %v454
        %1400 = vmatpush.msra.mxu0 %v446
        %1401 = vmatpush.msra.mxu0 %v438
        %1402 = vmatpush.msra.mxu0 %v430
        %1403 = vmatpush.msra.mxu0 %v422
        %1404 = vmatpush.msra.mxu0 %v414
        %1405 = vmatmul.f32.gmra.mxu0 %v271
        %v1406 = vpop.f32.mrf.mxu0
        %v1407 = vadd.f32 %v1387, %v1406
        %1408 = vdwg.mxu0
        %1409 = vmatpush.msra.mxu0 %v662
        %1410 = vmatpush.msra.mxu0 %v654
        %1411 = vmatpush.msra.mxu0 %v646
        %1412 = vmatpush.msra.mxu0 %v638
        %1413 = vmatpush.msra.mxu0 %v630
        %1414 = vmatpush.msra.mxu0 %v622
        %1415 = vmatpush.msra.mxu0 %v614
        %1416 = vmatpush.msra.mxu0 %v606
        %1417 = vmatpush.msra.mxu0 %v598
        %1418 = vmatpush.msra.mxu0 %v590
        %1419 = vmatpush.msra.mxu0 %v582
        %1420 = vmatpush.msra.mxu0 %v574
        %1421 = vmatpush.msra.mxu0 %v566
        %1422 = vmatpush.msra.mxu0 %v558
        %1423 = vmatpush.msra.mxu0 %v550
        %1424 = vmatpush.msra.mxu0 %v542
        %1425 = vmatmul.f32.gmra.mxu0 %v275
        %v1426 = vpop.f32.mrf.mxu0
        %v1427 = vadd.f32 %v1407, %v1426
        %1428 = vdwg.mxu0
        %1429 = vmatpush.msra.mxu0 %v790
        %1430 = vmatpush.msra.mxu0 %v782
        %1431 = vmatpush.msra.mxu0 %v774
        %1432 = vmatpush.msra.mxu0 %v766
        %1433 = vmatpush.msra.mxu0 %v758
        %1434 = vmatpush.msra.mxu0 %v750
        %1435 = vmatpush.msra.mxu0 %v742
        %1436 = vmatpush.msra.mxu0 %v734
        %1437 = vmatpush.msra.mxu0 %v726
        %1438 = vmatpush.msra.mxu0 %v718
        %1439 = vmatpush.msra.mxu0 %v710
        %1440 = vmatpush.msra.mxu0 %v702
        %1441 = vmatpush.msra.mxu0 %v694
        %1442 = vmatpush.msra.mxu0 %v686
        %1443 = vmatpush.msra.mxu0 %v678
        %1444 = vmatpush.msra.mxu0 %v670
        %1445 = vmatmul.f32.gmra.mxu0 %v276
        %v1446 = vpop.f32.mrf.mxu0
        %v1447 = vadd.f32 %v1427, %v1446
        %1448 = vdwg.mxu0
        %v1449 = vxor.u32 %v887, 2147483648
        %v1450 = vxor.u32 %v967, 2147483648
        %v1451 = vxor.u32 %v1047, 2147483648
        %v1452 = vxor.u32 %v1127, 2147483648
        %v1453 = vmul.f32 %v1449, 1.442695
        %v1454 = vpow.pop %v1453
        %v1455 = vmul.f32 %v1450, 1.442695
        %v1456 = vpow.pop %v1455
        %v1457 = vmul.f32 %v1451, 1.442695
        %v1458 = vpow.pop %v1457
        %v1459 = vmul.f32 %v1452, 1.442695
        %v1460 = vpow.pop %v1459
        %v1461 = vadd.f32 %v1454, 1.0
        %v1462 = vadd.f32 %v1456, 1.0
        %v1463 = vadd.f32 %v1458, 1.0
        %v1464 = vadd.f32 %v1460, 1.0
        %v1465 = vrcp.pop %v1461
        %v1466 = vmul.f32 %v1461, %v1465
        %v1467 = vsub.f32 1.0, %v1466
        %v1468 = vmul.f32 %v1465, %v1467
        %v1469 = vadd.f32 %v1465, %v1468
        %vm1470 = vweird.f32 %v1461
        %vm1471 = vweird.f32 %v1465
        %vm1472 = vmor %vm1470, %vm1471
        %v1473 = vsel %vm1472, %v1465, %v1469
        %v1474 = vand.u32 2147483647, %v1461
        %vm1475 = vcmp.eq.f32.partialorder %v1474, 8.507059e+37
        %v1476 = vand.u32 %v1461, 2147483648
        %v1477 = vor.u32 1.1754944e-38, %v1476
        %v1478 = vsel %vm1475, %v1477, %v1473
        %v1479 = vmul.f32 1.0, %v1478
        %v1480 = vrcp.pop %v1462
        %v1481 = vmul.f32 %v1462, %v1480
        %v1482 = vsub.f32 1.0, %v1481
        %v1483 = vmul.f32 %v1480, %v1482
        %v1484 = vadd.f32 %v1480, %v1483
        %vm1485 = vweird.f32 %v1462
        %vm1486 = vweird.f32 %v1480
        %vm1487 = vmor %vm1485, %vm1486
        %v1488 = vsel %vm1487, %v1480, %v1484
        %v1489 = vand.u32 2147483647, %v1462
        %vm1490 = vcmp.eq.f32.partialorder %v1489, 8.507059e+37
        %v1491 = vand.u32 %v1462, 2147483648
        %v1492 = vor.u32 1.1754944e-38, %v1491
        %v1493 = vsel %vm1490, %v1492, %v1488
        %v1494 = vmul.f32 1.0, %v1493
        %v1495 = vrcp.pop %v1463
        %v1496 = vmul.f32 %v1463, %v1495
        %v1497 = vsub.f32 1.0, %v1496
        %v1498 = vmul.f32 %v1495, %v1497
        %v1499 = vadd.f32 %v1495, %v1498
        %vm1500 = vweird.f32 %v1463
        %vm1501 = vweird.f32 %v1495
        %vm1502 = vmor %vm1500, %vm1501
        %v1503 = vsel %vm1502, %v1495, %v1499
        %v1504 = vand.u32 2147483647, %v1463
        %vm1505 = vcmp.eq.f32.partialorder %v1504, 8.507059e+37
        %v1506 = vand.u32 %v1463, 2147483648
        %v1507 = vor.u32 1.1754944e-38, %v1506
        %v1508 = vsel %vm1505, %v1507, %v1503
        %v1509 = vmul.f32 1.0, %v1508
        %v1510 = vrcp.pop %v1464
        %v1511 = vmul.f32 %v1464, %v1510
        %v1512 = vsub.f32 1.0, %v1511
        %v1513 = vmul.f32 %v1510, %v1512
        %v1514 = vadd.f32 %v1510, %v1513
        %vm1515 = vweird.f32 %v1464
        %vm1516 = vweird.f32 %v1510
        %vm1517 = vmor %vm1515, %vm1516
        %v1518 = vsel %vm1517, %v1510, %v1514
        %v1519 = vand.u32 2147483647, %v1464
        %vm1520 = vcmp.eq.f32.partialorder %v1519, 8.507059e+37
        %v1521 = vand.u32 %v1464, 2147483648
        %v1522 = vor.u32 1.1754944e-38, %v1521
        %v1523 = vsel %vm1520, %v1522, %v1518
        %v1524 = vmul.f32 1.0, %v1523
        %v1525 = vmul.f32 %v1479, %v1367
        %v1526 = vmul.f32 %v1494, %v1447
        %v1527 = vadd.f32 %v1207, %v1525
        %v1528 = vadd.f32 %v1287, %v1526
        %v1529 = vtanh.pop %v1527
        %v1530 = vtanh.pop %v1528
        %v1531 = vsub.f32 1.0, %v1509
        %v1532 = vsub.f32 1.0, %v1524
        %v1533 = vmul.f32 %v1531, %v1529
        %v1534 = vmul.f32 %v1532, %v1530
        %v1535 = vmul.f32 %v1509, %v275
        %v1536 = vmul.f32 %v1524, %v276
        %v1537 = vadd.f32 %v1533, %v1535
        %v1538 = vadd.f32 %v1534, %v1536
        %v1541 = vrot.slane %v1538, 7
        %vm1542 = vcmask 1040384
        %v1543 = vsel %vm1542, %v1537, %v1541
        %v1545 = vlaneseq
        %vm1546 = vcmp.ge.s32.totalorder %v1545, 0
        %vm1547 = vcmp.lt.s32.totalorder %v1545, 256
        %vm1548 = vmand %vm1546, %vm1547
        %1549 = vst.msk [vmem:[#allocation2] sm:$0x3] %vm1548, %v1543
        %1550 = vst.msk [vmem:[%s247] sm:$0x3] %vm1548, %v1543
        %p1551 = scmp.lt.s32.totalorder %s27, 7
        %s1552 = scalar_select %p1551, %s27, 7
        %s1553 = smul.addr %s1552, 2
        %s1554 = scalar_lea.vmem %s5, %s1553
        // Predicated region
        $region57: #{encoder_rnn_forward_seq.1} parent=35 // pred_check
          %p1555 = pneg %p129
        $region58: #{encoder_rnn_forward_seq.1} parent=35 // pred_check_branch
          %1557 = sbr.rel (%p1555) target = $region60
        $region59: #{encoder_rnn_forward_seq.1} parent=35 // pred_region
          _
        $region60: #{encoder_rnn_forward_seq.1} parent=35 // pred_fallthru
          _
      $region36: #{encoder_rnn_forward_seq.1} parent=5 // pred_fallthru
        _
      %p1558 = scmp.le.s32.totalorder 2, %s22
      // Predicated region
      $region61: #{encoder_rnn_forward_seq.1} parent=5 // pred_check
        %p1559 = pneg %p1558
      $region62: #{encoder_rnn_forward_seq.1} parent=5 // pred_check_branch
        %1561 = sbr.rel (%p1559) target = $region64
      $region63: #{encoder_rnn_forward_seq.1} parent=5 // pred_region
        %s1562 = ssub.s32 %s22, 2
        // Predicated region
        $region65: #{encoder_rnn_forward_seq.1} parent=63 // pred_check
          %p1563 = pneg %p135
        $region66: #{encoder_rnn_forward_seq.1} parent=63 // pred_check_branch
          %1565 = sbr.rel (%p1563) target = $region68
        $region67: #{encoder_rnn_forward_seq.1} parent=63 // pred_region
          %p1566 = scmp.lt.s32.totalorder %s28, 7
          %s1567 = scalar_select %p1566, %s28, 7
          %s1568 = smul.addr %s1567, 2
          %s1569 = scalar_lea.vmem %s5, %s1568
        $region68: #{encoder_rnn_forward_seq.1} parent=63 // pred_fallthru
          _
      $region64: #{encoder_rnn_forward_seq.1} parent=5 // pred_fallthru
        _
    $region6: #{encoder_rnn_forward_seq.1} parent=1 // loop_footer
      %s26 = sadd.s32 1, %s22
    $region7: #{encoder_rnn_forward_seq.1} parent=1 // loop_footer_branch
      %21 = sbr.rel target = $region3
    $region8: #{encoder_rnn_forward_seq.1} parent=1 // loop_exit
      _
    %1570 = vsyncpa [#allocation6], 1
    %s1571 = scalar_lea.sflag [#allocation6], 1
    %1572 = vsyncpa %s1571, 1
    %1573 = vsyncpa [#allocation8], 1
    %1574 = vsyncpa [#allocation11], 1

</llo_original>
